<compile_context>
chip_gen: v7x
topology: tpu7x:2x2x1
jax: 0.10.0
libtpu: 0.0.40
codegen_flags: <defaults>
</compile_context>

<pallas_src>
import functools

import jax
import jax.numpy as jnp
from jax.experimental import pallas as pl
from jax.experimental.pallas import tpu as pltpu

K_CHEB = 4   # ChebConv order used by BidirectionalNet
_LANE = 128

_VMEM = pl.BlockSpec(memory_space=pltpu.MemorySpace.VMEM)


def _round_up(v, m):
    return (v + m - 1) // m * m


# ----------------------------------------------------------------------------
# Fused Pallas kernel: (ChebConv_fwd | ChebConv_rev) x 2 layers + pool + FC +
# log_softmax, all in one pallas_call.
# ----------------------------------------------------------------------------
def _cheb_branch(L_bf, twoL_bf, x_f32, w_bf, b_f32):
    """ChebConv(K=4) + bias + ReLU. bf16 MXU inputs, f32 accumulation/carries."""
    z0 = x_f32
    z1 = jnp.dot(L_bf, z0.astype(jnp.bfloat16), preferred_element_type=jnp.float32)
    z2 = jnp.dot(twoL_bf, z1.astype(jnp.bfloat16), preferred_element_type=jnp.float32) - z0
    z3 = jnp.dot(twoL_bf, z2.astype(jnp.bfloat16), preferred_element_type=jnp.float32) - z1
    # Fold the K per-order feature matmuls into a single wide matmul:
    # [Z0 | Z1 | Z2 | Z3] @ reshape(W, (K*Fin, Fout)).
    zs = jnp.concatenate([z0, z1, z2, z3], axis=-1).astype(jnp.bfloat16)
    out = jnp.dot(zs, w_bf, preferred_element_type=jnp.float32) + b_f32
    return jnp.maximum(out, 0.0)


def _fused_forward_kernel(num_classes,
                          lf_ref, lr_ref, x_ref,
                          w11_ref, b11_ref, w12_ref, b12_ref,
                          w21_ref, b21_ref, w22_ref, b22_ref,
                          p_ref, fcw_ref, fcb_ref, out_ref):
    Lf = lf_ref[...]            # (N, N) bf16 — resident in VMEM for both layers
    Lr = lr_ref[...]
    twoLf = Lf + Lf             # 2*L computed once, reused for all recurrences
    twoLr = Lr + Lr
    x = x_ref[...]              # (N, Fpad) f32

    # Layer 1: fwd + rev fused into one lane-dense (N, 128) intermediate.
    h1 = jnp.concatenate(
        [_cheb_branch(Lf, twoLf, x, w11_ref[...], b11_ref[...]),
         _cheb_branch(Lr, twoLr, x, w12_ref[...], b12_ref[...])], axis=-1)

    # Layer 2: fwd + rev fused into one (N, 512) intermediate.
    h2 = jnp.concatenate(
        [_cheb_branch(Lf, twoLf, h1, w21_ref[...], b21_ref[...]),
         _cheb_branch(Lr, twoLr, h1, w22_ref[...], b22_ref[...])], axis=-1)

    # global_mean_pool as P @ h2  (P row b = 1/|graph b| on its nodes).
    pooled = jnp.dot(p_ref[...].astype(jnp.bfloat16), h2.astype(jnp.bfloat16),
                     preferred_element_type=jnp.float32)                 # (B, 512)
    logits = jnp.dot(pooled.astype(jnp.bfloat16), fcw_ref[...],
                     preferred_element_type=jnp.float32) + fcb_ref[...]  # (B, Cpad)

    # Mask the padded class columns, then log-softmax.
    col = jax.lax.broadcasted_iota(jnp.int32, logits.shape, 1)
    logits = jnp.where(col < num_classes, logits, -1e30)
    m = jnp.max(logits, axis=-1, keepdims=True)
    s = logits - m
    lse = jnp.log(jnp.sum(jnp.exp(s), axis=-1, keepdims=True))
    out_ref[...] = s - lse


# ----------------------------------------------------------------------------
# Glue: dense scaled Laplacian (PyG ChebConv, sym norm, lambda_max = 2.0)
# ----------------------------------------------------------------------------
def scaled_laplacian_dense(edge_index, num_nodes):
    """Dense operator M with (M @ x)[i] = sum_{edge (j->i)} -d[j]^-1/2 d[i]^-1/2 x[j]."""
    row, col = edge_index[0], edge_index[1]      # row = source j, col = target i
    w = jnp.ones(row.shape[0], jnp.float32)
    deg = jnp.zeros((num_nodes,), jnp.float32).at[row].add(w)
    dis = jnp.where(deg > 0, jax.lax.rsqrt(jnp.maximum(deg, 1e-12)), 0.0)
    norm = dis[row] * w * dis[col]
    M = jnp.zeros((num_nodes, num_nodes), jnp.float32).at[col, row].add(-norm)
    return M


# ----------------------------------------------------------------------------
# Parameters
# ----------------------------------------------------------------------------
def _glorot(key, shape):
    fan_in, fan_out = shape[-2], shape[-1]
    lim = jnp.sqrt(6.0 / (fan_in + fan_out))
    return jax.random.uniform(key, shape, jnp.float32, -lim, lim)


def init_params(key, num_classes, num_node_features):
    ks = jax.random.split(key, 9)
    return {
        "w11": _glorot(ks[0], (K_CHEB, num_node_features, 64)),
        "b11": jnp.zeros((64,), jnp.float32),
        "w12": _glorot(ks[1], (K_CHEB, num_node_features, 64)),
        "b12": jnp.zeros((64,), jnp.float32),
        "w21": _glorot(ks[2], (K_CHEB, 128, 256)),
        "b21": jnp.zeros((256,), jnp.float32),
        "w22": _glorot(ks[3], (K_CHEB, 128, 256)),
        "b22": jnp.zeros((256,), jnp.float32),
        "fc_w": _glorot(ks[4], (512, num_classes)),  # stored as (in, out)
        "fc_b": jnp.zeros((num_classes,), jnp.float32),
    }


def _stack_cheb_weight(w, fin_pad):
    """(K, Fin, Fout) -> zero-pad Fin -> (K*Fin_pad, Fout) bf16 for the folded matmul."""
    k, fin, fout = w.shape
    w = jnp.pad(w, ((0, 0), (0, fin_pad - fin), (0, 0)))
    return w.reshape(k * fin_pad, fout).astype(jnp.bfloat16)


# ----------------------------------------------------------------------------
# Forward pass
# ----------------------------------------------------------------------------
def bidirectional_net_forward(params, x, edge_index, batch, num_graphs):
    n, fin = x.shape
    num_classes = params["fc_w"].shape[1]
    n_pad = _round_up(max(n, 16), 16)                 # sublane/packing friendly
    fin_pad = _round_up(max(fin, _LANE), _LANE)       # lane-dense layer-1 input
    c_pad = _round_up(max(num_classes, _LANE), _LANE)  # lane-dense logits/output

    # Dense scaled Laplacians (sym norm, lambda_max=2 => L_hat = -D^-1/2 A D^-1/2),
    # cast to bf16 (entries in [-1, 0]) to halve DMA bytes / VMEM footprint.
    L_fwd = scaled_laplacian_dense(edge_index, n)
    L_rev = scaled_laplacian_dense(edge_index[::-1], n)     # edge_index[[1, 0]]
    L_fwd = jnp.pad(L_fwd, ((0, n_pad - n), (0, n_pad - n))).astype(jnp.bfloat16)
    L_rev = jnp.pad(L_rev, ((0, n_pad - n), (0, n_pad - n))).astype(jnp.bfloat16)

    x_p = jnp.pad(x.astype(jnp.float32), ((0, n_pad - n), (0, fin_pad - fin)))

    # global_mean_pool as a (B, N_pad) pooling matrix; padded node columns = 0.
    onehot = (batch[None, :] == jnp.arange(num_graphs)[:, None]).astype(jnp.float32)
    counts = jnp.maximum(onehot.sum(axis=1, keepdims=True), 1.0)
    P = jnp.pad(onehot / counts, ((0, 0), (0, n_pad - n)))

    # Stacked / padded parameters (bf16 matmul weights, f32 biases).
    w11 = _stack_cheb_weight(params["w11"], fin_pad)
    w12 = _stack_cheb_weight(params["w12"], fin_pad)
    w21 = _stack_cheb_weight(params["w21"], params["w21"].shape[1])
    w22 = _stack_cheb_weight(params["w22"], params["w22"].shape[1])
    b11 = params["b11"].reshape(1, -1).astype(jnp.float32)
    b12 = params["b12"].reshape(1, -1).astype(jnp.float32)
    b21 = params["b21"].reshape(1, -1).astype(jnp.float32)
    b22 = params["b22"].reshape(1, -1).astype(jnp.float32)
    fc_w = jnp.pad(params["fc_w"],
                   ((0, 0), (0, c_pad - num_classes))).astype(jnp.bfloat16)
    fc_b = jnp.pad(params["fc_b"],
                   (0, c_pad - num_classes)).reshape(1, c_pad).astype(jnp.float32)

    kernel = functools.partial(_fused_forward_kernel, num_classes)
    out = pl.pallas_call(
        kernel,
        out_shape=jax.ShapeDtypeStruct((num_graphs, c_pad), jnp.float32),
        in_specs=[_VMEM] * 14,
        out_specs=_VMEM,
        compiler_params=pltpu.CompilerParams(
            vmem_limit_bytes=32 * 1024 * 1024),
    )(L_fwd, L_rev, x_p,
      w11, b11, w12, b12, w21, b21, w22, b22,
      P, fc_w, fc_b)

    return out[:, :num_classes]


# ----------------------------------------------------------------------------
# Pure-JAX reference (for an in-script sanity check only)
# ----------------------------------------------------------------------------
def _reference_forward(params, x, edge_index, batch, num_graphs):
    n = x.shape[0]
    Lf = scaled_laplacian_dense(edge_index, n)
    Lr = scaled_laplacian_dense(edge_index[::-1], n)

    def cheb(L, x, w, b):
        z0, z1 = x, L @ x
        acc = z0 @ w[0] + z1 @ w[1]
        for k in range(2, K_CHEB):
            z2 = 2.0 * (L @ z1) - z0
            acc = acc + z2 @ w[k]
            z0, z1 = z1, z2
        return jax.nn.relu(acc + b)

    h1 = jnp.concatenate([cheb(Lf, x, params["w11"], params["b11"]),
                          cheb(Lr, x, params["w12"], params["b12"])], axis=1)
    h2 = jnp.concatenate([cheb(Lf, h1, params["w21"], params["b21"]),
                          cheb(Lr, h1, params["w22"], params["b22"])], axis=1)
    onehot = (batch[None, :] == jnp.arange(num_graphs)[:, None]).astype(jnp.float32)
    pooled = (onehot @ h2) / jnp.maximum(onehot.sum(1, keepdims=True), 1.0)
    logits = pooled @ params["fc_w"] + params["fc_b"]
    return jax.nn.log_softmax(logits, axis=1)


# ----------------------------------------------------------------------------
if __name__ == "__main__":
    num_classes = 4
    num_node_features = 4
    nodes_per_graph = 8
    num_graphs = 2
    N = nodes_per_graph * num_graphs

    key = jax.random.PRNGKey(0)
    k_params, k_x = jax.random.split(key)

    params = init_params(k_params, num_classes, num_node_features)
    x = jax.random.normal(k_x, (N, num_node_features), jnp.float32)

    # Simple directed tree-ish edges (parent -> child) inside each graph.
    src, dst = [], []
    for g in range(num_graphs):
        base = g * nodes_per_graph
        for i in range(nodes_per_graph - 1):
            src.append(base + i)
            dst.append(base + i + 1)
        src.append(base)              # one extra branch per graph
        dst.append(base + nodes_per_graph // 2)
    edge_index = jnp.array([src, dst], dtype=jnp.int32)   # (2, E)

    batch = jnp.repeat(jnp.arange(num_graphs, dtype=jnp.int32), nodes_per_graph)

    out = bidirectional_net_forward(params, x, edge_index, batch, num_graphs)
    out = jax.block_until_ready(out)

    assert out.shape == (num_graphs, num_classes)
    # log_softmax rows should exponentiate-sum to 1.
    assert bool(jnp.all(jnp.abs(jnp.exp(out).sum(axis=1) - 1.0) < 1e-4))
    # Match the pure-JAX (f32) reference within bf16-matmul tolerance.
    ref = _reference_forward(params, x, edge_index, batch, num_graphs)
    assert bool(jnp.max(jnp.abs(out - ref)) < 0.2)
    print("KERNEL_OK")
</pallas_src>

<mosaic_0001>
module attributes {stable_mosaic.version = 11 : i64} {
  func.func @_fused_forward_kernel(%arg0: memref<16x16xbf16, #tpu.memory_space<vmem>>, %arg1: memref<16x16xbf16, #tpu.memory_space<vmem>>, %arg2: memref<16x128xf32, #tpu.memory_space<vmem>>, %arg3: memref<512x64xbf16, #tpu.memory_space<vmem>>, %arg4: memref<1x64xf32, #tpu.memory_space<vmem>>, %arg5: memref<512x64xbf16, #tpu.memory_space<vmem>>, %arg6: memref<1x64xf32, #tpu.memory_space<vmem>>, %arg7: memref<512x256xbf16, #tpu.memory_space<vmem>>, %arg8: memref<1x256xf32, #tpu.memory_space<vmem>>, %arg9: memref<512x256xbf16, #tpu.memory_space<vmem>>, %arg10: memref<1x256xf32, #tpu.memory_space<vmem>>, %arg11: memref<2x16xf32, #tpu.memory_space<vmem>>, %arg12: memref<512x128xbf16, #tpu.memory_space<vmem>>, %arg13: memref<1x128xf32, #tpu.memory_space<vmem>>, %arg14: memref<2x128xf32, #tpu.memory_space<vmem>>) attributes {dimension_semantics = [], scalar_prefetch = 0 : i64, scratch_operands = 0 : i64, tpu.core_type = #tpu.core_type<tc>} {
    %c0 = arith.constant 0 : index
    %c0_0 = arith.constant 0 : index
    %0 = vector.load %arg0[%c0, %c0_0] : memref<16x16xbf16, #tpu.memory_space<vmem>>, vector<16x16xbf16>
    %c0_1 = arith.constant 0 : index
    %c0_2 = arith.constant 0 : index
    %1 = vector.load %arg1[%c0_1, %c0_2] : memref<16x16xbf16, #tpu.memory_space<vmem>>, vector<16x16xbf16>
    %2 = arith.addf %0, %0 : vector<16x16xbf16>
    %3 = arith.addf %1, %1 : vector<16x16xbf16>
    %c0_3 = arith.constant 0 : index
    %c0_4 = arith.constant 0 : index
    %4 = vector.load %arg2[%c0_3, %c0_4] : memref<16x128xf32, #tpu.memory_space<vmem>>, vector<16x128xf32>
    %c0_5 = arith.constant 0 : index
    %c0_6 = arith.constant 0 : index
    %5 = vector.load %arg3[%c0_5, %c0_6] : memref<512x64xbf16, #tpu.memory_space<vmem>>, vector<512x64xbf16>
    %c0_7 = arith.constant 0 : index
    %c0_8 = arith.constant 0 : index
    %6 = vector.load %arg4[%c0_7, %c0_8] : memref<1x64xf32, #tpu.memory_space<vmem>>, vector<1x64xf32>
    %7 = arith.truncf %4 : vector<16x128xf32> to vector<16x128xbf16>
    %cst = arith.constant dense<0.000000e+00> : vector<16x128xf32>
    %8 = tpu.matmul %0, %7, %cst {dimension_numbers = #tpu.dot_dimension_numbers<[1], [0], [0], [1], [0, 0, 1, 1], [], []>} : vector<16x16xbf16>, vector<16x128xbf16>, vector<16x128xf32> -> vector<16x128xf32>
    %9 = arith.truncf %8 : vector<16x128xf32> to vector<16x128xbf16>
    %cst_9 = arith.constant dense<0.000000e+00> : vector<16x128xf32>
    %10 = tpu.matmul %2, %9, %cst_9 {dimension_numbers = #tpu.dot_dimension_numbers<[1], [0], [0], [1], [0, 0, 1, 1], [], []>} : vector<16x16xbf16>, vector<16x128xbf16>, vector<16x128xf32> -> vector<16x128xf32>
    %11 = arith.subf %10, %4 : vector<16x128xf32>
    %12 = arith.truncf %11 : vector<16x128xf32> to vector<16x128xbf16>
    %cst_10 = arith.constant dense<0.000000e+00> : vector<16x128xf32>
    %13 = tpu.matmul %2, %12, %cst_10 {dimension_numbers = #tpu.dot_dimension_numbers<[1], [0], [0], [1], [0, 0, 1, 1], [], []>} : vector<16x16xbf16>, vector<16x128xbf16>, vector<16x128xf32> -> vector<16x128xf32>
    %14 = arith.subf %13, %8 : vector<16x128xf32>
    %15 = tpu.concatenate %4, %8, %11, %14 in 1 : vector<16x128xf32>, vector<16x128xf32>, vector<16x128xf32>, vector<16x128xf32> -> vector<16x512xf32>
    %16 = arith.truncf %15 : vector<16x512xf32> to vector<16x512xbf16>
    %cst_11 = arith.constant dense<0.000000e+00> : vector<16x64xf32>
    %17 = tpu.matmul %16, %5, %cst_11 {dimension_numbers = #tpu.dot_dimension_numbers<[1], [0], [0], [1], [0, 0, 1, 1], [], []>} : vector<16x512xbf16>, vector<512x64xbf16>, vector<16x64xf32> -> vector<16x64xf32>
    %18 = vector.broadcast %6 : vector<1x64xf32> to vector<16x64xf32>
    %19 = arith.addf %17, %18 : vector<16x64xf32>
    %cst_12 = arith.constant 0.000000e+00 : f32
    %20 = vector.broadcast %cst_12 : f32 to vector<16x64xf32>
    %21 = arith.maximumf %19, %20 : vector<16x64xf32>
    %c0_13 = arith.constant 0 : index
    %c0_14 = arith.constant 0 : index
    %22 = vector.load %arg5[%c0_13, %c0_14] : memref<512x64xbf16, #tpu.memory_space<vmem>>, vector<512x64xbf16>
    %c0_15 = arith.constant 0 : index
    %c0_16 = arith.constant 0 : index
    %23 = vector.load %arg6[%c0_15, %c0_16] : memref<1x64xf32, #tpu.memory_space<vmem>>, vector<1x64xf32>
    %24 = arith.truncf %4 : vector<16x128xf32> to vector<16x128xbf16>
    %cst_17 = arith.constant dense<0.000000e+00> : vector<16x128xf32>
    %25 = tpu.matmul %1, %24, %cst_17 {dimension_numbers = #tpu.dot_dimension_numbers<[1], [0], [0], [1], [0, 0, 1, 1], [], []>} : vector<16x16xbf16>, vector<16x128xbf16>, vector<16x128xf32> -> vector<16x128xf32>
    %26 = arith.truncf %25 : vector<16x128xf32> to vector<16x128xbf16>
    %cst_18 = arith.constant dense<0.000000e+00> : vector<16x128xf32>
    %27 = tpu.matmul %3, %26, %cst_18 {dimension_numbers = #tpu.dot_dimension_numbers<[1], [0], [0], [1], [0, 0, 1, 1], [], []>} : vector<16x16xbf16>, vector<16x128xbf16>, vector<16x128xf32> -> vector<16x128xf32>
    %28 = arith.subf %27, %4 : vector<16x128xf32>
    %29 = arith.truncf %28 : vector<16x128xf32> to vector<16x128xbf16>
    %cst_19 = arith.constant dense<0.000000e+00> : vector<16x128xf32>
    %30 = tpu.matmul %3, %29, %cst_19 {dimension_numbers = #tpu.dot_dimension_numbers<[1], [0], [0], [1], [0, 0, 1, 1], [], []>} : vector<16x16xbf16>, vector<16x128xbf16>, vector<16x128xf32> -> vector<16x128xf32>
    %31 = arith.subf %30, %25 : vector<16x128xf32>
    %32 = tpu.concatenate %4, %25, %28, %31 in 1 : vector<16x128xf32>, vector<16x128xf32>, vector<16x128xf32>, vector<16x128xf32> -> vector<16x512xf32>
    %33 = arith.truncf %32 : vector<16x512xf32> to vector<16x512xbf16>
    %cst_20 = arith.constant dense<0.000000e+00> : vector<16x64xf32>
    %34 = tpu.matmul %33, %22, %cst_20 {dimension_numbers = #tpu.dot_dimension_numbers<[1], [0], [0], [1], [0, 0, 1, 1], [], []>} : vector<16x512xbf16>, vector<512x64xbf16>, vector<16x64xf32> -> vector<16x64xf32>
    %35 = vector.broadcast %23 : vector<1x64xf32> to vector<16x64xf32>
    %36 = arith.addf %34, %35 : vector<16x64xf32>
    %cst_21 = arith.constant 0.000000e+00 : f32
    %37 = vector.broadcast %cst_21 : f32 to vector<16x64xf32>
    %38 = arith.maximumf %36, %37 : vector<16x64xf32>
    %39 = tpu.concatenate %21, %38 in 1 : vector<16x64xf32>, vector<16x64xf32> -> vector<16x128xf32>
    %c0_22 = arith.constant 0 : index
    %c0_23 = arith.constant 0 : index
    %40 = vector.load %arg7[%c0_22, %c0_23] : memref<512x256xbf16, #tpu.memory_space<vmem>>, vector<512x256xbf16>
    %c0_24 = arith.constant 0 : index
    %c0_25 = arith.constant 0 : index
    %41 = vector.load %arg8[%c0_24, %c0_25] : memref<1x256xf32, #tpu.memory_space<vmem>>, vector<1x256xf32>
    %42 = arith.truncf %39 : vector<16x128xf32> to vector<16x128xbf16>
    %cst_26 = arith.constant dense<0.000000e+00> : vector<16x128xf32>
    %43 = tpu.matmul %0, %42, %cst_26 {dimension_numbers = #tpu.dot_dimension_numbers<[1], [0], [0], [1], [0, 0, 1, 1], [], []>} : vector<16x16xbf16>, vector<16x128xbf16>, vector<16x128xf32> -> vector<16x128xf32>
    %44 = arith.truncf %43 : vector<16x128xf32> to vector<16x128xbf16>
    %cst_27 = arith.constant dense<0.000000e+00> : vector<16x128xf32>
    %45 = tpu.matmul %2, %44, %cst_27 {dimension_numbers = #tpu.dot_dimension_numbers<[1], [0], [0], [1], [0, 0, 1, 1], [], []>} : vector<16x16xbf16>, vector<16x128xbf16>, vector<16x128xf32> -> vector<16x128xf32>
    %46 = arith.subf %45, %39 : vector<16x128xf32>
    %47 = arith.truncf %46 : vector<16x128xf32> to vector<16x128xbf16>
    %cst_28 = arith.constant dense<0.000000e+00> : vector<16x128xf32>
    %48 = tpu.matmul %2, %47, %cst_28 {dimension_numbers = #tpu.dot_dimension_numbers<[1], [0], [0], [1], [0, 0, 1, 1], [], []>} : vector<16x16xbf16>, vector<16x128xbf16>, vector<16x128xf32> -> vector<16x128xf32>
    %49 = arith.subf %48, %43 : vector<16x128xf32>
    %50 = tpu.concatenate %39, %43, %46, %49 in 1 : vector<16x128xf32>, vector<16x128xf32>, vector<16x128xf32>, vector<16x128xf32> -> vector<16x512xf32>
    %51 = arith.truncf %50 : vector<16x512xf32> to vector<16x512xbf16>
    %cst_29 = arith.constant dense<0.000000e+00> : vector<16x256xf32>
    %52 = tpu.matmul %51, %40, %cst_29 {dimension_numbers = #tpu.dot_dimension_numbers<[1], [0], [0], [1], [0, 0, 1, 1], [], []>} : vector<16x512xbf16>, vector<512x256xbf16>, vector<16x256xf32> -> vector<16x256xf32>
    %53 = vector.broadcast %41 : vector<1x256xf32> to vector<16x256xf32>
    %54 = arith.addf %52, %53 : vector<16x256xf32>
    %cst_30 = arith.constant 0.000000e+00 : f32
    %55 = vector.broadcast %cst_30 : f32 to vector<16x256xf32>
    %56 = arith.maximumf %54, %55 : vector<16x256xf32>
    %c0_31 = arith.constant 0 : index
    %c0_32 = arith.constant 0 : index
    %57 = vector.load %arg9[%c0_31, %c0_32] : memref<512x256xbf16, #tpu.memory_space<vmem>>, vector<512x256xbf16>
    %c0_33 = arith.constant 0 : index
    %c0_34 = arith.constant 0 : index
    %58 = vector.load %arg10[%c0_33, %c0_34] : memref<1x256xf32, #tpu.memory_space<vmem>>, vector<1x256xf32>
    %59 = arith.truncf %39 : vector<16x128xf32> to vector<16x128xbf16>
    %cst_35 = arith.constant dense<0.000000e+00> : vector<16x128xf32>
    %60 = tpu.matmul %1, %59, %cst_35 {dimension_numbers = #tpu.dot_dimension_numbers<[1], [0], [0], [1], [0, 0, 1, 1], [], []>} : vector<16x16xbf16>, vector<16x128xbf16>, vector<16x128xf32> -> vector<16x128xf32>
    %61 = arith.truncf %60 : vector<16x128xf32> to vector<16x128xbf16>
    %cst_36 = arith.constant dense<0.000000e+00> : vector<16x128xf32>
    %62 = tpu.matmul %3, %61, %cst_36 {dimension_numbers = #tpu.dot_dimension_numbers<[1], [0], [0], [1], [0, 0, 1, 1], [], []>} : vector<16x16xbf16>, vector<16x128xbf16>, vector<16x128xf32> -> vector<16x128xf32>
    %63 = arith.subf %62, %39 : vector<16x128xf32>
    %64 = arith.truncf %63 : vector<16x128xf32> to vector<16x128xbf16>
    %cst_37 = arith.constant dense<0.000000e+00> : vector<16x128xf32>
    %65 = tpu.matmul %3, %64, %cst_37 {dimension_numbers = #tpu.dot_dimension_numbers<[1], [0], [0], [1], [0, 0, 1, 1], [], []>} : vector<16x16xbf16>, vector<16x128xbf16>, vector<16x128xf32> -> vector<16x128xf32>
    %66 = arith.subf %65, %60 : vector<16x128xf32>
    %67 = tpu.concatenate %39, %60, %63, %66 in 1 : vector<16x128xf32>, vector<16x128xf32>, vector<16x128xf32>, vector<16x128xf32> -> vector<16x512xf32>
    %68 = arith.truncf %67 : vector<16x512xf32> to vector<16x512xbf16>
    %cst_38 = arith.constant dense<0.000000e+00> : vector<16x256xf32>
    %69 = tpu.matmul %68, %57, %cst_38 {dimension_numbers = #tpu.dot_dimension_numbers<[1], [0], [0], [1], [0, 0, 1, 1], [], []>} : vector<16x512xbf16>, vector<512x256xbf16>, vector<16x256xf32> -> vector<16x256xf32>
    %70 = vector.broadcast %58 : vector<1x256xf32> to vector<16x256xf32>
    %71 = arith.addf %69, %70 : vector<16x256xf32>
    %cst_39 = arith.constant 0.000000e+00 : f32
    %72 = vector.broadcast %cst_39 : f32 to vector<16x256xf32>
    %73 = arith.maximumf %71, %72 : vector<16x256xf32>
    %74 = tpu.concatenate %56, %73 in 1 : vector<16x256xf32>, vector<16x256xf32> -> vector<16x512xf32>
    %c0_40 = arith.constant 0 : index
    %c0_41 = arith.constant 0 : index
    %75 = vector.load %arg11[%c0_40, %c0_41] : memref<2x16xf32, #tpu.memory_space<vmem>>, vector<2x16xf32>
    %76 = arith.truncf %75 : vector<2x16xf32> to vector<2x16xbf16>
    %77 = arith.truncf %74 : vector<16x512xf32> to vector<16x512xbf16>
    %cst_42 = arith.constant dense<0.000000e+00> : vector<2x512xf32>
    %78 = tpu.matmul %76, %77, %cst_42 {dimension_numbers = #tpu.dot_dimension_numbers<[1], [0], [0], [1], [0, 0, 1, 1], [], []>} : vector<2x16xbf16>, vector<16x512xbf16>, vector<2x512xf32> -> vector<2x512xf32>
    %79 = arith.truncf %78 : vector<2x512xf32> to vector<2x512xbf16>
    %c0_43 = arith.constant 0 : index
    %c0_44 = arith.constant 0 : index
    %80 = vector.load %arg12[%c0_43, %c0_44] : memref<512x128xbf16, #tpu.memory_space<vmem>>, vector<512x128xbf16>
    %cst_45 = arith.constant dense<0.000000e+00> : vector<2x128xf32>
    %81 = tpu.matmul %79, %80, %cst_45 {dimension_numbers = #tpu.dot_dimension_numbers<[1], [0], [0], [1], [0, 0, 1, 1], [], []>} : vector<2x512xbf16>, vector<512x128xbf16>, vector<2x128xf32> -> vector<2x128xf32>
    %c0_46 = arith.constant 0 : index
    %c0_47 = arith.constant 0 : index
    %82 = vector.load %arg13[%c0_46, %c0_47] : memref<1x128xf32, #tpu.memory_space<vmem>>, vector<1x128xf32>
    %83 = vector.broadcast %82 : vector<1x128xf32> to vector<2x128xf32>
    %84 = arith.addf %81, %83 : vector<2x128xf32>
    %85 = tpu.iota {dimensions = array<i32: 1>} : vector<2x128xi32>
    %c4_i32 = arith.constant 4 : i32
    %86 = vector.broadcast %c4_i32 : i32 to vector<2x128xi32>
    %87 = arith.cmpi slt, %85, %86 : vector<2x128xi32>
    %cst_48 = arith.constant -1.000000e+30 : f32
    %88 = vector.broadcast %cst_48 : f32 to vector<2x128xf32>
    %89 = arith.select %87, %84, %88 : vector<2x128xi1>, vector<2x128xf32>
    %cst_49 = arith.constant dense<0xFF800000> : vector<2xf32>
    %90 = vector.multi_reduction <maximumf>, %89, %cst_49 [1] : vector<2x128xf32> to vector<2xf32>
    %91 = vector.shape_cast %90 : vector<2xf32> to vector<2x1xf32>
    %92 = vector.broadcast %91 : vector<2x1xf32> to vector<2x128xf32>
    %93 = arith.subf %89, %92 : vector<2x128xf32>
    %94 = math.exp %93 : vector<2x128xf32>
    %cst_50 = arith.constant dense<0.000000e+00> : vector<2xf32>
    %95 = vector.multi_reduction <add>, %94, %cst_50 [1] : vector<2x128xf32> to vector<2xf32>
    %96 = vector.shape_cast %95 : vector<2xf32> to vector<2x1xf32>
    %97 = math.log %96 : vector<2x1xf32>
    %98 = vector.broadcast %97 : vector<2x1xf32> to vector<2x128xf32>
    %99 = arith.subf %93, %98 : vector<2x128xf32>
    %c0_51 = arith.constant 0 : index
    %c0_52 = arith.constant 0 : index
    %100 = vector.load %arg14[%c0_51, %c0_52] : memref<2x128xf32, #tpu.memory_space<vmem>>, vector<2x128xf32>
    tpu.vector_store %arg14[%c0_51, %c0_52], %99 {strides = array<i32>} : memref<2x128xf32, #tpu.memory_space<vmem>>, vector<2x128xf32>,
    return
  }
}

</mosaic_0001>

<llo_original>
// kernel: tpu_custom_call.1
$region0: #{tpu_custom_call.1}
  #allocation0 [shape = 'u32[]', space=smem, size = 0x4, offset = 0x4, fixed_abs, tag = 'smem constant byte address 0x4 - core index']
  #allocation1 [shape = 'u32[144,128]{1,0:T(1,128)}', space=vmem, size = 0x12000, scoped, tag = 'internal scratch']
  %s0 = inlined_call_operand.vmem [shape: bf16[16,16], index: 0, kind: input, shape index: {}]
  %s1 = inlined_call_operand.hbm [shape: bf16[16,16], index: 1, kind: input, shape index: {}]
  %s2 = inlined_call_operand.vmem [shape: f32[16,128], index: 2, kind: input, shape index: {}]
  %s3 = inlined_call_operand.vmem [shape: bf16[512,64], index: 3, kind: input, shape index: {}]
  %s4 = inlined_call_operand.hbm [shape: f32[1,64], index: 4, kind: input, shape index: {}]
  %s5 = inlined_call_operand.vmem [shape: bf16[512,64], index: 5, kind: input, shape index: {}]
  %s6 = inlined_call_operand.hbm [shape: f32[1,64], index: 6, kind: input, shape index: {}]
  %s7 = inlined_call_operand.vmem [shape: bf16[512,256], index: 7, kind: input, shape index: {}]
  %s8 = inlined_call_operand.vmem [shape: f32[1,256], index: 8, kind: input, shape index: {}]
  %s9 = inlined_call_operand.hbm [shape: bf16[512,256], index: 9, kind: input, shape index: {}]
  %s10 = inlined_call_operand.vmem [shape: f32[1,256], index: 10, kind: input, shape index: {}]
  %s11 = inlined_call_operand.vmem [shape: f32[2,16], index: 11, kind: input, shape index: {}]
  %s12 = inlined_call_operand.vmem [shape: bf16[512,128], index: 12, kind: input, shape index: {}]
  %s13 = inlined_call_operand.vmem [shape: f32[1,128], index: 13, kind: input, shape index: {}]
  %s14 = inlined_call_operand.hbm [shape: f32[2,128], index: 14, kind: output, shape index: {}]
  %s15 = sld [smem:[#allocation0]]
  $region82: #{tpu_custom_call.1} parent=0
    _
  %s17 = ssub.s32 1, %s15
  %s18 = scalar_select 0, %s17, %s15
  $region1: #{tpu_custom_call.1} parent=0
    #allocation2 [shape = 'u8[4096]{0}', space=vmem, size = 0x1000, scoped, tag = 'input window, operand 1, single buffered']
    #allocation3 [shape = 's32[1]{0}', space=sflag, size = 0x4, scoped, tag = 'scoped memory for tpu_custom_call.1']
    #allocation4 [shape = 's32[1]{0}', space=sflag, size = 0x4, scoped, tag = 'scoped memory for tpu_custom_call.1']
    #allocation5 [shape = 'u8[512]{0}', space=vmem, size = 0x400, scoped, tag = 'input window, operand 4, single buffered']
    #allocation6 [shape = 's32[1]{0}', space=sflag, size = 0x4, scoped, tag = 'scoped memory for tpu_custom_call.1']
    #allocation7 [shape = 'u8[512]{0}', space=vmem, size = 0x400, scoped, tag = 'input window, operand 6, single buffered']
    #allocation8 [shape = 'u8[262144]{0}', space=vmem, size = 0x40000, scoped, tag = 'input window, operand 9, single buffered']
    #allocation9 [shape = 's32[1]{0}', space=sflag, size = 0x4, scoped, tag = 'scoped memory for tpu_custom_call.1']
    #allocation10 [shape = 'u8[1024]{0}', space=vmem, size = 0x400, scoped, tag = 'output window, operand 0, single buffered']
    %19 = vsyncpa [#allocation3], 0
    %20 = vsyncpa [#allocation6], 0
    %21 = vsyncpa [#allocation9], 0
    %22 = vsyncpa [#allocation4], 0
    // Predicated region
    $region2: #{tpu_custom_call.1} parent=1 // pred_check
      _
    $region3: #{tpu_custom_call.1} parent=1 // pred_check_branch
      %24 = sbr.rel (0) target = $region5
    $region4: #{tpu_custom_call.1} parent=1 // pred_region
      _
    $region5: #{tpu_custom_call.1} parent=1 // pred_fallthru
      _
    // Predicated region
    $region6: #{tpu_custom_call.1} parent=1 // pred_check
      _
    $region7: #{tpu_custom_call.1} parent=1 // pred_check_branch
      %26 = sbr.rel (0) target = $region9
    $region8: #{tpu_custom_call.1} parent=1 // pred_region
      %s28 = ssub.s32 128, 128
      %29 = vsyncadd [#allocation3], %s28
      %s30 = sshll.u32 [#allocation2], 4
      %s31 = int_to_ptr.vmem [resolvable:$true] %s30
      %36 = dma.hbm_to_vmem [thread:$0]  %s1, 128, %s31, [#allocation3], 64, 64, 4
    $region9: #{tpu_custom_call.1} parent=1 // pred_fallthru
      _
    // Predicated region
    $region10: #{tpu_custom_call.1} parent=1 // pred_check
      _
    $region11: #{tpu_custom_call.1} parent=1 // pred_check_branch
      %38 = sbr.rel (0) target = $region13
    $region12: #{tpu_custom_call.1} parent=1 // pred_region
      _
    $region13: #{tpu_custom_call.1} parent=1 // pred_fallthru
      _
    // Predicated region
    $region14: #{tpu_custom_call.1} parent=1 // pred_check
      _
    $region15: #{tpu_custom_call.1} parent=1 // pred_check_branch
      %40 = sbr.rel (0) target = $region17
    $region16: #{tpu_custom_call.1} parent=1 // pred_region
      _
    $region17: #{tpu_custom_call.1} parent=1 // pred_fallthru
      _
    // Predicated region
    $region18: #{tpu_custom_call.1} parent=1 // pred_check
      _
    $region19: #{tpu_custom_call.1} parent=1 // pred_check_branch
      %42 = sbr.rel (0) target = $region21
    $region20: #{tpu_custom_call.1} parent=1 // pred_region
      %s44 = ssub.s32 16, 16
      %45 = vsyncadd [#allocation6], %s44
      %s47 = sshll.u32 [#allocation5], 4
      %s48 = int_to_ptr.vmem [resolvable:$true] %s47
      %50 = dma.hbm_to_vmem [thread:$0]  %s4, 16, %s48, [#allocation6]
    $region21: #{tpu_custom_call.1} parent=1 // pred_fallthru
      _
    // Predicated region
    $region22: #{tpu_custom_call.1} parent=1 // pred_check
      _
    $region23: #{tpu_custom_call.1} parent=1 // pred_check_branch
      %52 = sbr.rel (0) target = $region25
    $region24: #{tpu_custom_call.1} parent=1 // pred_region
      _
    $region25: #{tpu_custom_call.1} parent=1 // pred_fallthru
      _
    // Predicated region
    $region26: #{tpu_custom_call.1} parent=1 // pred_check
      _
    $region27: #{tpu_custom_call.1} parent=1 // pred_check_branch
      %54 = sbr.rel (0) target = $region29
    $region28: #{tpu_custom_call.1} parent=1 // pred_region
      %s56 = ssub.s32 16, 16
      %57 = vsyncadd [#allocation6], %s56
      %s59 = sshll.u32 [#allocation7], 4
      %s60 = int_to_ptr.vmem [resolvable:$true] %s59
      %62 = dma.hbm_to_vmem [thread:$0]  %s6, 16, %s60, [#allocation6]
    $region29: #{tpu_custom_call.1} parent=1 // pred_fallthru
      _
    // Predicated region
    $region30: #{tpu_custom_call.1} parent=1 // pred_check
      _
    $region31: #{tpu_custom_call.1} parent=1 // pred_check_branch
      %64 = sbr.rel (0) target = $region33
    $region32: #{tpu_custom_call.1} parent=1 // pred_region
      _
    $region33: #{tpu_custom_call.1} parent=1 // pred_fallthru
      _
    // Predicated region
    $region34: #{tpu_custom_call.1} parent=1 // pred_check
      _
    $region35: #{tpu_custom_call.1} parent=1 // pred_check_branch
      %66 = sbr.rel (0) target = $region37
    $region36: #{tpu_custom_call.1} parent=1 // pred_region
      _
    $region37: #{tpu_custom_call.1} parent=1 // pred_fallthru
      _
    // Predicated region
    $region38: #{tpu_custom_call.1} parent=1 // pred_check
      _
    $region39: #{tpu_custom_call.1} parent=1 // pred_check_branch
      %68 = sbr.rel (0) target = $region41
    $region40: #{tpu_custom_call.1} parent=1 // pred_region
      %s70 = ssub.s32 8192, 8192
      %71 = vsyncadd [#allocation9], %s70
      %s72 = sshll.u32 [#allocation8], 4
      %s73 = int_to_ptr.vmem [resolvable:$true] %s72
      %78 = dma.hbm_to_vmem [thread:$0]  %s9, 8192, %s73, [#allocation9], 128, 128, 8
    $region41: #{tpu_custom_call.1} parent=1 // pred_fallthru
      _
    // Predicated region
    $region42: #{tpu_custom_call.1} parent=1 // pred_check
      _
    $region43: #{tpu_custom_call.1} parent=1 // pred_check_branch
      %80 = sbr.rel (0) target = $region45
    $region44: #{tpu_custom_call.1} parent=1 // pred_region
      _
    $region45: #{tpu_custom_call.1} parent=1 // pred_fallthru
      _
    // Predicated region
    $region46: #{tpu_custom_call.1} parent=1 // pred_check
      _
    $region47: #{tpu_custom_call.1} parent=1 // pred_check_branch
      %82 = sbr.rel (0) target = $region49
    $region48: #{tpu_custom_call.1} parent=1 // pred_region
      _
    $region49: #{tpu_custom_call.1} parent=1 // pred_fallthru
      _
    // Predicated region
    $region50: #{tpu_custom_call.1} parent=1 // pred_check
      _
    $region51: #{tpu_custom_call.1} parent=1 // pred_check_branch
      %84 = sbr.rel (0) target = $region53
    $region52: #{tpu_custom_call.1} parent=1 // pred_region
      _
    $region53: #{tpu_custom_call.1} parent=1 // pred_fallthru
      _
    // Predicated region
    $region54: #{tpu_custom_call.1} parent=1 // pred_check
      _
    $region55: #{tpu_custom_call.1} parent=1 // pred_check_branch
      %86 = sbr.rel (0) target = $region57
    $region56: #{tpu_custom_call.1} parent=1 // pred_region
      _
    $region57: #{tpu_custom_call.1} parent=1 // pred_fallthru
      _
    // Predicated region
    $region58: #{tpu_custom_call.1} parent=1 // pred_check
      _
    $region59: #{tpu_custom_call.1} parent=1 // pred_check_branch
      %88 = sbr.rel (0) target = $region61
    $region60: #{tpu_custom_call.1} parent=1 // pred_region
      %89 = dma.done [#allocation3], 128
    $region61: #{tpu_custom_call.1} parent=1 // pred_fallthru
      _
    // Predicated region
    $region62: #{tpu_custom_call.1} parent=1 // pred_check
      _
    $region63: #{tpu_custom_call.1} parent=1 // pred_check_branch
      %91 = sbr.rel (0) target = $region65
    $region64: #{tpu_custom_call.1} parent=1 // pred_region
      %92 = dma.done [#allocation6], 16
    $region65: #{tpu_custom_call.1} parent=1 // pred_fallthru
      _
    // Predicated region
    $region66: #{tpu_custom_call.1} parent=1 // pred_check
      _
    $region67: #{tpu_custom_call.1} parent=1 // pred_check_branch
      %94 = sbr.rel (0) target = $region69
    $region68: #{tpu_custom_call.1} parent=1 // pred_region
      %95 = dma.done [#allocation6], 16
    $region69: #{tpu_custom_call.1} parent=1 // pred_fallthru
      _
    // Predicated region
    $region70: #{tpu_custom_call.1} parent=1 // pred_check
      _
    $region71: #{tpu_custom_call.1} parent=1 // pred_check_branch
      %97 = sbr.rel (0) target = $region73
    $region72: #{tpu_custom_call.1} parent=1 // pred_region
      %98 = dma.done [#allocation9], 8192
    $region73: #{tpu_custom_call.1} parent=1 // pred_fallthru
      _
    %v100 = vld [vmem:[%s0] sm:$0xf]
    %v101 = vld [vmem:[%s0 + $0x4] sm:$0xf]
    %v102 = vld [vmem:[#allocation2] sm:$0xf]
    %v103 = vld [vmem:[#allocation2 + $0x4] sm:$0xf]
    %v104 = vadd.bf16 %v100, %v100
    %v105 = vadd.bf16 %v101, %v101
    %v106 = vadd.bf16 %v102, %v102
    %v107 = vadd.bf16 %v103, %v103
    %v108 = vld [vmem:[%s2] sm:$0xff]
    %v109 = vld [vmem:[%s2 + $0x8] sm:$0xff]
    %v110 = vld [vmem:[%s3] sm:$0xf]
    %v111 = vld [vmem:[%s3 + $0x4] sm:$0xf]
    %v112 = vld [vmem:[%s3 + $0x8] sm:$0xf]
    %v113 = vld [vmem:[%s3 + $0xc] sm:$0xf]
    %v114 = vld [vmem:[%s3 + $0x10] sm:$0xf]
    %v115 = vld [vmem:[%s3 + $0x14] sm:$0xf]
    %v116 = vld [vmem:[%s3 + $0x18] sm:$0xf]
    %v117 = vld [vmem:[%s3 + $0x1c] sm:$0xf]
    %v118 = vld [vmem:[%s3 + $0x20] sm:$0xf]
    %v119 = vld [vmem:[%s3 + $0x24] sm:$0xf]
    %v120 = vld [vmem:[%s3 + $0x28] sm:$0xf]
    %v121 = vld [vmem:[%s3 + $0x2c] sm:$0xf]
    %v122 = vld [vmem:[%s3 + $0x30] sm:$0xf]
    %v123 = vld [vmem:[%s3 + $0x34] sm:$0xf]
    %v124 = vld [vmem:[%s3 + $0x38] sm:$0xf]
    %v125 = vld [vmem:[%s3 + $0x3c] sm:$0xf]
    %v126 = vld [vmem:[%s3 + $0x40] sm:$0xf]
    %v127 = vld [vmem:[%s3 + $0x44] sm:$0xf]
    %v128 = vld [vmem:[%s3 + $0x48] sm:$0xf]
    %v129 = vld [vmem:[%s3 + $0x4c] sm:$0xf]
    %v130 = vld [vmem:[%s3 + $0x50] sm:$0xf]
    %v131 = vld [vmem:[%s3 + $0x54] sm:$0xf]
    %v132 = vld [vmem:[%s3 + $0x58] sm:$0xf]
    %v133 = vld [vmem:[%s3 + $0x5c] sm:$0xf]
    %v134 = vld [vmem:[%s3 + $0x60] sm:$0xf]
    %v135 = vld [vmem:[%s3 + $0x64] sm:$0xf]
    %v136 = vld [vmem:[%s3 + $0x68] sm:$0xf]
    %v137 = vld [vmem:[%s3 + $0x6c] sm:$0xf]
    %v138 = vld [vmem:[%s3 + $0x70] sm:$0xf]
    %v139 = vld [vmem:[%s3 + $0x74] sm:$0xf]
    %v140 = vld [vmem:[%s3 + $0x78] sm:$0xf]
    %v141 = vld [vmem:[%s3 + $0x7c] sm:$0xf]
    %v142 = vld [vmem:[%s3 + $0x80] sm:$0xf]
    %v143 = vld [vmem:[%s3 + $0x84] sm:$0xf]
    %v144 = vld [vmem:[%s3 + $0x88] sm:$0xf]
    %v145 = vld [vmem:[%s3 + $0x8c] sm:$0xf]
    %v146 = vld [vmem:[%s3 + $0x90] sm:$0xf]
    %v147 = vld [vmem:[%s3 + $0x94] sm:$0xf]
    %v148 = vld [vmem:[%s3 + $0x98] sm:$0xf]
    %v149 = vld [vmem:[%s3 + $0x9c] sm:$0xf]
    %v150 = vld [vmem:[%s3 + $0xa0] sm:$0xf]
    %v151 = vld [vmem:[%s3 + $0xa4] sm:$0xf]
    %v152 = vld [vmem:[%s3 + $0xa8] sm:$0xf]
    %v153 = vld [vmem:[%s3 + $0xac] sm:$0xf]
    %v154 = vld [vmem:[%s3 + $0xb0] sm:$0xf]
    %v155 = vld [vmem:[%s3 + $0xb4] sm:$0xf]
    %v156 = vld [vmem:[%s3 + $0xb8] sm:$0xf]
    %v157 = vld [vmem:[%s3 + $0xbc] sm:$0xf]
    %v158 = vld [vmem:[%s3 + $0xc0] sm:$0xf]
    %v159 = vld [vmem:[%s3 + $0xc4] sm:$0xf]
    %v160 = vld [vmem:[%s3 + $0xc8] sm:$0xf]
    %v161 = vld [vmem:[%s3 + $0xcc] sm:$0xf]
    %v162 = vld [vmem:[%s3 + $0xd0] sm:$0xf]
    %v163 = vld [vmem:[%s3 + $0xd4] sm:$0xf]
    %v164 = vld [vmem:[%s3 + $0xd8] sm:$0xf]
    %v165 = vld [vmem:[%s3 + $0xdc] sm:$0xf]
    %v166 = vld [vmem:[%s3 + $0xe0] sm:$0xf]
    %v167 = vld [vmem:[%s3 + $0xe4] sm:$0xf]
    %v168 = vld [vmem:[%s3 + $0xe8] sm:$0xf]
    %v169 = vld [vmem:[%s3 + $0xec] sm:$0xf]
    %v170 = vld [vmem:[%s3 + $0xf0] sm:$0xf]
    %v171 = vld [vmem:[%s3 + $0xf4] sm:$0xf]
    %v172 = vld [vmem:[%s3 + $0xf8] sm:$0xf]
    %v173 = vld [vmem:[%s3 + $0xfc] sm:$0xf]
    %v174 = vld [vmem:[#allocation5] sm:$0x1]
    %v175 = vpack.c.bf16 %v109, %v108
    %v178 = vunpack.c.l.b16 %v100
    %v179 = vunpack.c.l.b16 %v101
    %v180 = vpack.c.b16 %v179, %v178
    %vm181 = vcmask 130048
    %v183 = vsel %vm181, %v180, 0
    %185 = vmatprep.subr.bf16.mxu0 0
    %186 = vmatpush1.bf16.msra.mxu0 %v175
    %187 = vmatprep.subr.bf16.mxu0 0
    %188 = vmatpush1.bf16.msra.mxu0 0
    %189 = vmatprep.subr.bf16.mxu0 0
    %190 = vmatpush1.bf16.msra.mxu0 0
    %191 = vmatprep.subr.bf16.mxu0 0
    %192 = vmatpush1.bf16.msra.mxu0 0
    %193 = vmatprep.subr.bf16.mxu0 0
    %194 = vmatpush1.bf16.msra.mxu0 0
    %195 = vmatprep.subr.bf16.mxu0 0
    %196 = vmatpush1.bf16.msra.mxu0 0
    %197 = vmatprep.subr.bf16.mxu0 0
    %198 = vmatpush1.bf16.msra.mxu0 0
    %199 = vmatprep.subr.bf16.mxu0 0
    %200 = vmatpush1.bf16.msra.mxu0 0
    %201 = vmatprep.subr.bf16.mxu0 0
    %202 = vmatpush1.bf16.msra.mxu0 0
    %203 = vmatprep.subr.bf16.mxu0 0
    %204 = vmatpush1.bf16.msra.mxu0 0
    %205 = vmatprep.subr.bf16.mxu0 0
    %206 = vmatpush1.bf16.msra.mxu0 0
    %207 = vmatprep.subr.bf16.mxu0 0
    %208 = vmatpush1.bf16.msra.mxu0 0
    %209 = vmatprep.subr.bf16.mxu0 0
    %210 = vmatpush1.bf16.msra.mxu0 0
    %211 = vmatprep.subr.bf16.mxu0 0
    %212 = vmatpush1.bf16.msra.mxu0 0
    %213 = vmatprep.subr.bf16.mxu0 0
    %214 = vmatpush1.bf16.msra.mxu0 0
    %215 = vmatprep.subr.bf16.mxu0 0
    %216 = vmatpush1.bf16.msra.mxu0 0
    %217 = vmatprep.mubr.bf16.mxu0 0
    %218 = vmatmul.mubr.bf16.gmra.mrb[0].mxu0 %v183
    %v219 = vpop.f32.mrb[0].mxu0
    %v220 = vadd.f32 0.0, %v219
    %v221 = vpop.f32.mrb[0].mxu0
    %v222 = vpop.f32.mrb[0].mxu0
    %v223 = vadd.f32 0.0, %v222
    %v224 = vpop.f32.mrb[0].mxu0
    %225 = vdwg.mxu0
    %v226 = vpack.c.bf16 %v223, %v220
    %v229 = vunpack.c.l.b16 %v104
    %v230 = vunpack.c.l.b16 %v105
    %v231 = vpack.c.b16 %v230, %v229
    %v233 = vsel %vm181, %v231, 0
    %235 = vmatprep.subr.bf16.mxu0 0
    %236 = vmatpush1.bf16.msra.mxu0 %v226
    %237 = vmatprep.subr.bf16.mxu0 0
    %238 = vmatpush1.bf16.msra.mxu0 0
    %239 = vmatprep.subr.bf16.mxu0 0
    %240 = vmatpush1.bf16.msra.mxu0 0
    %241 = vmatprep.subr.bf16.mxu0 0
    %242 = vmatpush1.bf16.msra.mxu0 0
    %243 = vmatprep.subr.bf16.mxu0 0
    %244 = vmatpush1.bf16.msra.mxu0 0
    %245 = vmatprep.subr.bf16.mxu0 0
    %246 = vmatpush1.bf16.msra.mxu0 0
    %247 = vmatprep.subr.bf16.mxu0 0
    %248 = vmatpush1.bf16.msra.mxu0 0
    %249 = vmatprep.subr.bf16.mxu0 0
    %250 = vmatpush1.bf16.msra.mxu0 0
    %251 = vmatprep.subr.bf16.mxu0 0
    %252 = vmatpush1.bf16.msra.mxu0 0
    %253 = vmatprep.subr.bf16.mxu0 0
    %254 = vmatpush1.bf16.msra.mxu0 0
    %255 = vmatprep.subr.bf16.mxu0 0
    %256 = vmatpush1.bf16.msra.mxu0 0
    %257 = vmatprep.subr.bf16.mxu0 0
    %258 = vmatpush1.bf16.msra.mxu0 0
    %259 = vmatprep.subr.bf16.mxu0 0
    %260 = vmatpush1.bf16.msra.mxu0 0
    %261 = vmatprep.subr.bf16.mxu0 0
    %262 = vmatpush1.bf16.msra.mxu0 0
    %263 = vmatprep.subr.bf16.mxu0 0
    %264 = vmatpush1.bf16.msra.mxu0 0
    %265 = vmatprep.subr.bf16.mxu0 0
    %266 = vmatpush1.bf16.msra.mxu0 0
    %267 = vmatprep.mubr.bf16.mxu0 0
    %268 = vmatmul.mubr.bf16.gmra.mrb[0].mxu0 %v233
    %v269 = vpop.f32.mrb[0].mxu0
    %v270 = vadd.f32 0.0, %v269
    %v271 = vpop.f32.mrb[0].mxu0
    %v272 = vpop.f32.mrb[0].mxu0
    %v273 = vadd.f32 0.0, %v272
    %v274 = vpop.f32.mrb[0].mxu0
    %275 = vdwg.mxu0
    %v276 = vsub.f32 %v270, %v108
    %v277 = vsub.f32 %v273, %v109
    %v278 = vpack.c.bf16 %v277, %v276
    %279 = vmatprep.subr.bf16.mxu0 0
    %280 = vmatpush1.bf16.msra.mxu0 %v278
    %281 = vmatprep.subr.bf16.mxu0 0
    %282 = vmatpush1.bf16.msra.mxu0 0
    %283 = vmatprep.subr.bf16.mxu0 0
    %284 = vmatpush1.bf16.msra.mxu0 0
    %285 = vmatprep.subr.bf16.mxu0 0
    %286 = vmatpush1.bf16.msra.mxu0 0
    %287 = vmatprep.subr.bf16.mxu0 0
    %288 = vmatpush1.bf16.msra.mxu0 0
    %289 = vmatprep.subr.bf16.mxu0 0
    %290 = vmatpush1.bf16.msra.mxu0 0
    %291 = vmatprep.subr.bf16.mxu0 0
    %292 = vmatpush1.bf16.msra.mxu0 0
    %293 = vmatprep.subr.bf16.mxu0 0
    %294 = vmatpush1.bf16.msra.mxu0 0
    %295 = vmatprep.subr.bf16.mxu0 0
    %296 = vmatpush1.bf16.msra.mxu0 0
    %297 = vmatprep.subr.bf16.mxu0 0
    %298 = vmatpush1.bf16.msra.mxu0 0
    %299 = vmatprep.subr.bf16.mxu0 0
    %300 = vmatpush1.bf16.msra.mxu0 0
    %301 = vmatprep.subr.bf16.mxu0 0
    %302 = vmatpush1.bf16.msra.mxu0 0
    %303 = vmatprep.subr.bf16.mxu0 0
    %304 = vmatpush1.bf16.msra.mxu0 0
    %305 = vmatprep.subr.bf16.mxu0 0
    %306 = vmatpush1.bf16.msra.mxu0 0
    %307 = vmatprep.subr.bf16.mxu0 0
    %308 = vmatpush1.bf16.msra.mxu0 0
    %309 = vmatprep.subr.bf16.mxu0 0
    %310 = vmatpush1.bf16.msra.mxu0 0
    %311 = vmatprep.mubr.bf16.mxu0 0
    %312 = vmatmul.mubr.bf16.gmra.mrb[0].mxu0 %v233
    %v313 = vpop.f32.mrb[0].mxu0
    %v314 = vadd.f32 0.0, %v313
    %v315 = vpop.f32.mrb[0].mxu0
    %v316 = vpop.f32.mrb[0].mxu0
    %v317 = vadd.f32 0.0, %v316
    %v318 = vpop.f32.mrb[0].mxu0
    %319 = vdwg.mxu0
    %v320 = vsub.f32 %v314, %v220
    %v321 = vsub.f32 %v317, %v223
    %v322 = vpack.c.bf16 %v321, %v320
    %v324 = vlaneseq
    %v325 = vshrl.u32 %v324, 7
    %v326 = vsub.s32 0, %v325
    %v327 = vrot.slane %v174, %v326
    %v393 = vunpack.c.l.b16 %v110
    %v394 = vunpack.c.l.b16 %v111
    %v395 = vunpack.c.l.b16 %v112
    %v396 = vunpack.c.l.b16 %v113
    %v397 = vunpack.c.l.b16 %v114
    %v398 = vunpack.c.l.b16 %v115
    %v399 = vunpack.c.l.b16 %v116
    %v400 = vunpack.c.l.b16 %v117
    %v401 = vunpack.c.l.b16 %v118
    %v402 = vunpack.c.l.b16 %v119
    %v403 = vunpack.c.l.b16 %v120
    %v404 = vunpack.c.l.b16 %v121
    %v405 = vunpack.c.l.b16 %v122
    %v406 = vunpack.c.l.b16 %v123
    %v407 = vunpack.c.l.b16 %v124
    %v408 = vunpack.c.l.b16 %v125
    %v409 = vunpack.c.l.b16 %v126
    %v410 = vunpack.c.l.b16 %v127
    %v411 = vunpack.c.l.b16 %v128
    %v412 = vunpack.c.l.b16 %v129
    %v413 = vunpack.c.l.b16 %v130
    %v414 = vunpack.c.l.b16 %v131
    %v415 = vunpack.c.l.b16 %v132
    %v416 = vunpack.c.l.b16 %v133
    %v417 = vunpack.c.l.b16 %v134
    %v418 = vunpack.c.l.b16 %v135
    %v419 = vunpack.c.l.b16 %v136
    %v420 = vunpack.c.l.b16 %v137
    %v421 = vunpack.c.l.b16 %v138
    %v422 = vunpack.c.l.b16 %v139
    %v423 = vunpack.c.l.b16 %v140
    %v424 = vunpack.c.l.b16 %v141
    %v425 = vunpack.c.l.b16 %v142
    %v426 = vunpack.c.l.b16 %v143
    %v427 = vunpack.c.l.b16 %v144
    %v428 = vunpack.c.l.b16 %v145
    %v429 = vunpack.c.l.b16 %v146
    %v430 = vunpack.c.l.b16 %v147
    %v431 = vunpack.c.l.b16 %v148
    %v432 = vunpack.c.l.b16 %v149
    %v433 = vunpack.c.l.b16 %v150
    %v434 = vunpack.c.l.b16 %v151
    %v435 = vunpack.c.l.b16 %v152
    %v436 = vunpack.c.l.b16 %v153
    %v437 = vunpack.c.l.b16 %v154
    %v438 = vunpack.c.l.b16 %v155
    %v439 = vunpack.c.l.b16 %v156
    %v440 = vunpack.c.l.b16 %v157
    %v441 = vunpack.c.l.b16 %v158
    %v442 = vunpack.c.l.b16 %v159
    %v443 = vunpack.c.l.b16 %v160
    %v444 = vunpack.c.l.b16 %v161
    %v445 = vunpack.c.l.b16 %v162
    %v446 = vunpack.c.l.b16 %v163
    %v447 = vunpack.c.l.b16 %v164
    %v448 = vunpack.c.l.b16 %v165
    %v449 = vunpack.c.l.b16 %v166
    %v450 = vunpack.c.l.b16 %v167
    %v451 = vunpack.c.l.b16 %v168
    %v452 = vunpack.c.l.b16 %v169
    %v453 = vunpack.c.l.b16 %v170
    %v454 = vunpack.c.l.b16 %v171
    %v455 = vunpack.c.l.b16 %v172
    %v456 = vunpack.c.l.b16 %v173
    %v457 = vpack.c.b16 %v394, %v393
    %v458 = vpack.c.b16 %v396, %v395
    %v459 = vpack.c.b16 %v398, %v397
    %v460 = vpack.c.b16 %v400, %v399
    %v461 = vpack.c.b16 %v402, %v401
    %v462 = vpack.c.b16 %v404, %v403
    %v463 = vpack.c.b16 %v406, %v405
    %v464 = vpack.c.b16 %v408, %v407
    %v465 = vpack.c.b16 %v410, %v409
    %v466 = vpack.c.b16 %v412, %v411
    %v467 = vpack.c.b16 %v414, %v413
    %v468 = vpack.c.b16 %v416, %v415
    %v469 = vpack.c.b16 %v418, %v417
    %v470 = vpack.c.b16 %v420, %v419
    %v471 = vpack.c.b16 %v422, %v421
    %v472 = vpack.c.b16 %v424, %v423
    %v473 = vpack.c.b16 %v426, %v425
    %v474 = vpack.c.b16 %v428, %v427
    %v475 = vpack.c.b16 %v430, %v429
    %v476 = vpack.c.b16 %v432, %v431
    %v477 = vpack.c.b16 %v434, %v433
    %v478 = vpack.c.b16 %v436, %v435
    %v479 = vpack.c.b16 %v438, %v437
    %v480 = vpack.c.b16 %v440, %v439
    %v481 = vpack.c.b16 %v442, %v441
    %v482 = vpack.c.b16 %v444, %v443
    %v483 = vpack.c.b16 %v446, %v445
    %v484 = vpack.c.b16 %v448, %v447
    %v485 = vpack.c.b16 %v450, %v449
    %v486 = vpack.c.b16 %v452, %v451
    %v487 = vpack.c.b16 %v454, %v453
    %v488 = vpack.c.b16 %v456, %v455
    %521 = vmatprep.subr.bf16.mxu0 0
    %522 = vmatpush1.bf16.msra.mxu0 %v457
    %523 = vmatprep.subr.bf16.mxu0 0
    %524 = vmatpush1.bf16.msra.mxu0 %v458
    %525 = vmatprep.subr.bf16.mxu0 0
    %526 = vmatpush1.bf16.msra.mxu0 %v459
    %527 = vmatprep.subr.bf16.mxu0 0
    %528 = vmatpush1.bf16.msra.mxu0 %v460
    %529 = vmatprep.subr.bf16.mxu0 0
    %530 = vmatpush1.bf16.msra.mxu0 %v461
    %531 = vmatprep.subr.bf16.mxu0 0
    %532 = vmatpush1.bf16.msra.mxu0 %v462
    %533 = vmatprep.subr.bf16.mxu0 0
    %534 = vmatpush1.bf16.msra.mxu0 %v463
    %535 = vmatprep.subr.bf16.mxu0 0
    %536 = vmatpush1.bf16.msra.mxu0 %v464
    %537 = vmatprep.subr.bf16.mxu0 0
    %538 = vmatpush1.bf16.msra.mxu0 %v465
    %539 = vmatprep.subr.bf16.mxu0 0
    %540 = vmatpush1.bf16.msra.mxu0 %v466
    %541 = vmatprep.subr.bf16.mxu0 0
    %542 = vmatpush1.bf16.msra.mxu0 %v467
    %543 = vmatprep.subr.bf16.mxu0 0
    %544 = vmatpush1.bf16.msra.mxu0 %v468
    %545 = vmatprep.subr.bf16.mxu0 0
    %546 = vmatpush1.bf16.msra.mxu0 %v469
    %547 = vmatprep.subr.bf16.mxu0 0
    %548 = vmatpush1.bf16.msra.mxu0 %v470
    %549 = vmatprep.subr.bf16.mxu0 0
    %550 = vmatpush1.bf16.msra.mxu0 %v471
    %551 = vmatprep.subr.bf16.mxu0 0
    %552 = vmatpush1.bf16.msra.mxu0 %v472
    %553 = vmatprep.mubr.bf16.mxu0 %v226
    %554 = vmatmul.mubr.bf16.gmra.mrb[0].mxu0 %v175
    %v555 = vpop.f32.mrb[0].mxu0
    %v556 = vadd.f32 %v327, %v555
    %v557 = vpop.f32.mrb[0].mxu0
    %v558 = vpop.f32.mrb[0].mxu0
    %v559 = vadd.f32 %v327, %v558
    %v560 = vpop.f32.mrb[0].mxu0
    %561 = vdwg.mxu0
    %562 = vmatprep.subr.bf16.mxu0 0
    %563 = vmatpush1.bf16.msra.mxu0 %v473
    %564 = vmatprep.subr.bf16.mxu0 0
    %565 = vmatpush1.bf16.msra.mxu0 %v474
    %566 = vmatprep.subr.bf16.mxu0 0
    %567 = vmatpush1.bf16.msra.mxu0 %v475
    %568 = vmatprep.subr.bf16.mxu0 0
    %569 = vmatpush1.bf16.msra.mxu0 %v476
    %570 = vmatprep.subr.bf16.mxu0 0
    %571 = vmatpush1.bf16.msra.mxu0 %v477
    %572 = vmatprep.subr.bf16.mxu0 0
    %573 = vmatpush1.bf16.msra.mxu0 %v478
    %574 = vmatprep.subr.bf16.mxu0 0
    %575 = vmatpush1.bf16.msra.mxu0 %v479
    %576 = vmatprep.subr.bf16.mxu0 0
    %577 = vmatpush1.bf16.msra.mxu0 %v480
    %578 = vmatprep.subr.bf16.mxu0 0
    %579 = vmatpush1.bf16.msra.mxu0 %v481
    %580 = vmatprep.subr.bf16.mxu0 0
    %581 = vmatpush1.bf16.msra.mxu0 %v482
    %582 = vmatprep.subr.bf16.mxu0 0
    %583 = vmatpush1.bf16.msra.mxu0 %v483
    %584 = vmatprep.subr.bf16.mxu0 0
    %585 = vmatpush1.bf16.msra.mxu0 %v484
    %586 = vmatprep.subr.bf16.mxu0 0
    %587 = vmatpush1.bf16.msra.mxu0 %v485
    %588 = vmatprep.subr.bf16.mxu0 0
    %589 = vmatpush1.bf16.msra.mxu0 %v486
    %590 = vmatprep.subr.bf16.mxu0 0
    %591 = vmatpush1.bf16.msra.mxu0 %v487
    %592 = vmatprep.subr.bf16.mxu0 0
    %593 = vmatpush1.bf16.msra.mxu0 %v488
    %594 = vmatprep.mubr.bf16.mxu0 %v322
    %595 = vmatmul.mubr.bf16.gmra.mrb[0].mxu0 %v278
    %v596 = vpop.f32.mrb[0].mxu0
    %v597 = vadd.f32 %v556, %v596
    %v598 = vpop.f32.mrb[0].mxu0
    %v599 = vpop.f32.mrb[0].mxu0
    %v600 = vadd.f32 %v559, %v599
    %v601 = vpop.f32.mrb[0].mxu0
    %602 = vdwg.mxu0
    %v603 = vmax.f32 %v597, 0.0
    %v604 = vmax.f32 %v600, 0.0
    %v605 = vld [vmem:[%s5] sm:$0xf]
    %v606 = vld [vmem:[%s5 + $0x4] sm:$0xf]
    %v607 = vld [vmem:[%s5 + $0x8] sm:$0xf]
    %v608 = vld [vmem:[%s5 + $0xc] sm:$0xf]
    %v609 = vld [vmem:[%s5 + $0x10] sm:$0xf]
    %v610 = vld [vmem:[%s5 + $0x14] sm:$0xf]
    %v611 = vld [vmem:[%s5 + $0x18] sm:$0xf]
    %v612 = vld [vmem:[%s5 + $0x1c] sm:$0xf]
    %v613 = vld [vmem:[%s5 + $0x20] sm:$0xf]
    %v614 = vld [vmem:[%s5 + $0x24] sm:$0xf]
    %v615 = vld [vmem:[%s5 + $0x28] sm:$0xf]
    %v616 = vld [vmem:[%s5 + $0x2c] sm:$0xf]
    %v617 = vld [vmem:[%s5 + $0x30] sm:$0xf]
    %v618 = vld [vmem:[%s5 + $0x34] sm:$0xf]
    %v619 = vld [vmem:[%s5 + $0x38] sm:$0xf]
    %v620 = vld [vmem:[%s5 + $0x3c] sm:$0xf]
    %v621 = vld [vmem:[%s5 + $0x40] sm:$0xf]
    %v622 = vld [vmem:[%s5 + $0x44] sm:$0xf]
    %v623 = vld [vmem:[%s5 + $0x48] sm:$0xf]
    %v624 = vld [vmem:[%s5 + $0x4c] sm:$0xf]
    %v625 = vld [vmem:[%s5 + $0x50] sm:$0xf]
    %v626 = vld [vmem:[%s5 + $0x54] sm:$0xf]
    %v627 = vld [vmem:[%s5 + $0x58] sm:$0xf]
    %v628 = vld [vmem:[%s5 + $0x5c] sm:$0xf]
    %v629 = vld [vmem:[%s5 + $0x60] sm:$0xf]
    %v630 = vld [vmem:[%s5 + $0x64] sm:$0xf]
    %v631 = vld [vmem:[%s5 + $0x68] sm:$0xf]
    %v632 = vld [vmem:[%s5 + $0x6c] sm:$0xf]
    %v633 = vld [vmem:[%s5 + $0x70] sm:$0xf]
    %v634 = vld [vmem:[%s5 + $0x74] sm:$0xf]
    %v635 = vld [vmem:[%s5 + $0x78] sm:$0xf]
    %v636 = vld [vmem:[%s5 + $0x7c] sm:$0xf]
    %v637 = vld [vmem:[%s5 + $0x80] sm:$0xf]
    %v638 = vld [vmem:[%s5 + $0x84] sm:$0xf]
    %v639 = vld [vmem:[%s5 + $0x88] sm:$0xf]
    %v640 = vld [vmem:[%s5 + $0x8c] sm:$0xf]
    %v641 = vld [vmem:[%s5 + $0x90] sm:$0xf]
    %v642 = vld [vmem:[%s5 + $0x94] sm:$0xf]
    %v643 = vld [vmem:[%s5 + $0x98] sm:$0xf]
    %v644 = vld [vmem:[%s5 + $0x9c] sm:$0xf]
    %v645 = vld [vmem:[%s5 + $0xa0] sm:$0xf]
    %v646 = vld [vmem:[%s5 + $0xa4] sm:$0xf]
    %v647 = vld [vmem:[%s5 + $0xa8] sm:$0xf]
    %v648 = vld [vmem:[%s5 + $0xac] sm:$0xf]
    %v649 = vld [vmem:[%s5 + $0xb0] sm:$0xf]
    %v650 = vld [vmem:[%s5 + $0xb4] sm:$0xf]
    %v651 = vld [vmem:[%s5 + $0xb8] sm:$0xf]
    %v652 = vld [vmem:[%s5 + $0xbc] sm:$0xf]
    %v653 = vld [vmem:[%s5 + $0xc0] sm:$0xf]
    %v654 = vld [vmem:[%s5 + $0xc4] sm:$0xf]
    %v655 = vld [vmem:[%s5 + $0xc8] sm:$0xf]
    %v656 = vld [vmem:[%s5 + $0xcc] sm:$0xf]
    %v657 = vld [vmem:[%s5 + $0xd0] sm:$0xf]
    %v658 = vld [vmem:[%s5 + $0xd4] sm:$0xf]
    %v659 = vld [vmem:[%s5 + $0xd8] sm:$0xf]
    %v660 = vld [vmem:[%s5 + $0xdc] sm:$0xf]
    %v661 = vld [vmem:[%s5 + $0xe0] sm:$0xf]
    %v662 = vld [vmem:[%s5 + $0xe4] sm:$0xf]
    %v663 = vld [vmem:[%s5 + $0xe8] sm:$0xf]
    %v664 = vld [vmem:[%s5 + $0xec] sm:$0xf]
    %v665 = vld [vmem:[%s5 + $0xf0] sm:$0xf]
    %v666 = vld [vmem:[%s5 + $0xf4] sm:$0xf]
    %v667 = vld [vmem:[%s5 + $0xf8] sm:$0xf]
    %v668 = vld [vmem:[%s5 + $0xfc] sm:$0xf]
    %v669 = vld [vmem:[#allocation7] sm:$0x1]
    %v672 = vunpack.c.l.b16 %v102
    %v673 = vunpack.c.l.b16 %v103
    %v674 = vpack.c.b16 %v673, %v672
    %v676 = vsel %vm181, %v674, 0
    %678 = vmatprep.subr.bf16.mxu0 0
    %679 = vmatpush1.bf16.msra.mxu0 %v175
    %680 = vmatprep.subr.bf16.mxu0 0
    %681 = vmatpush1.bf16.msra.mxu0 0
    %682 = vmatprep.subr.bf16.mxu0 0
    %683 = vmatpush1.bf16.msra.mxu0 0
    %684 = vmatprep.subr.bf16.mxu0 0
    %685 = vmatpush1.bf16.msra.mxu0 0
    %686 = vmatprep.subr.bf16.mxu0 0
    %687 = vmatpush1.bf16.msra.mxu0 0
    %688 = vmatprep.subr.bf16.mxu0 0
    %689 = vmatpush1.bf16.msra.mxu0 0
    %690 = vmatprep.subr.bf16.mxu0 0
    %691 = vmatpush1.bf16.msra.mxu0 0
    %692 = vmatprep.subr.bf16.mxu0 0
    %693 = vmatpush1.bf16.msra.mxu0 0
    %694 = vmatprep.subr.bf16.mxu0 0
    %695 = vmatpush1.bf16.msra.mxu0 0
    %696 = vmatprep.subr.bf16.mxu0 0
    %697 = vmatpush1.bf16.msra.mxu0 0
    %698 = vmatprep.subr.bf16.mxu0 0
    %699 = vmatpush1.bf16.msra.mxu0 0
    %700 = vmatprep.subr.bf16.mxu0 0
    %701 = vmatpush1.bf16.msra.mxu0 0
    %702 = vmatprep.subr.bf16.mxu0 0
    %703 = vmatpush1.bf16.msra.mxu0 0
    %704 = vmatprep.subr.bf16.mxu0 0
    %705 = vmatpush1.bf16.msra.mxu0 0
    %706 = vmatprep.subr.bf16.mxu0 0
    %707 = vmatpush1.bf16.msra.mxu0 0
    %708 = vmatprep.subr.bf16.mxu0 0
    %709 = vmatpush1.bf16.msra.mxu0 0
    %710 = vmatprep.mubr.bf16.mxu0 0
    %711 = vmatmul.mubr.bf16.gmra.mrb[0].mxu0 %v676
    %v712 = vpop.f32.mrb[0].mxu0
    %v713 = vadd.f32 0.0, %v712
    %v714 = vpop.f32.mrb[0].mxu0
    %v715 = vpop.f32.mrb[0].mxu0
    %v716 = vadd.f32 0.0, %v715
    %v717 = vpop.f32.mrb[0].mxu0
    %718 = vdwg.mxu0
    %v719 = vpack.c.bf16 %v716, %v713
    %v722 = vunpack.c.l.b16 %v106
    %v723 = vunpack.c.l.b16 %v107
    %v724 = vpack.c.b16 %v723, %v722
    %v726 = vsel %vm181, %v724, 0
    %728 = vmatprep.subr.bf16.mxu0 0
    %729 = vmatpush1.bf16.msra.mxu0 %v719
    %730 = vmatprep.subr.bf16.mxu0 0
    %731 = vmatpush1.bf16.msra.mxu0 0
    %732 = vmatprep.subr.bf16.mxu0 0
    %733 = vmatpush1.bf16.msra.mxu0 0
    %734 = vmatprep.subr.bf16.mxu0 0
    %735 = vmatpush1.bf16.msra.mxu0 0
    %736 = vmatprep.subr.bf16.mxu0 0
    %737 = vmatpush1.bf16.msra.mxu0 0
    %738 = vmatprep.subr.bf16.mxu0 0
    %739 = vmatpush1.bf16.msra.mxu0 0
    %740 = vmatprep.subr.bf16.mxu0 0
    %741 = vmatpush1.bf16.msra.mxu0 0
    %742 = vmatprep.subr.bf16.mxu0 0
    %743 = vmatpush1.bf16.msra.mxu0 0
    %744 = vmatprep.subr.bf16.mxu0 0
    %745 = vmatpush1.bf16.msra.mxu0 0
    %746 = vmatprep.subr.bf16.mxu0 0
    %747 = vmatpush1.bf16.msra.mxu0 0
    %748 = vmatprep.subr.bf16.mxu0 0
    %749 = vmatpush1.bf16.msra.mxu0 0
    %750 = vmatprep.subr.bf16.mxu0 0
    %751 = vmatpush1.bf16.msra.mxu0 0
    %752 = vmatprep.subr.bf16.mxu0 0
    %753 = vmatpush1.bf16.msra.mxu0 0
    %754 = vmatprep.subr.bf16.mxu0 0
    %755 = vmatpush1.bf16.msra.mxu0 0
    %756 = vmatprep.subr.bf16.mxu0 0
    %757 = vmatpush1.bf16.msra.mxu0 0
    %758 = vmatprep.subr.bf16.mxu0 0
    %759 = vmatpush1.bf16.msra.mxu0 0
    %760 = vmatprep.mubr.bf16.mxu0 0
    %761 = vmatmul.mubr.bf16.gmra.mrb[0].mxu0 %v726
    %v762 = vpop.f32.mrb[0].mxu0
    %v763 = vadd.f32 0.0, %v762
    %v764 = vpop.f32.mrb[0].mxu0
    %v765 = vpop.f32.mrb[0].mxu0
    %v766 = vadd.f32 0.0, %v765
    %v767 = vpop.f32.mrb[0].mxu0
    %768 = vdwg.mxu0
    %v769 = vsub.f32 %v763, %v108
    %v770 = vsub.f32 %v766, %v109
    %v771 = vpack.c.bf16 %v770, %v769
    %772 = vmatprep.subr.bf16.mxu0 0
    %773 = vmatpush1.bf16.msra.mxu0 %v771
    %774 = vmatprep.subr.bf16.mxu0 0
    %775 = vmatpush1.bf16.msra.mxu0 0
    %776 = vmatprep.subr.bf16.mxu0 0
    %777 = vmatpush1.bf16.msra.mxu0 0
    %778 = vmatprep.subr.bf16.mxu0 0
    %779 = vmatpush1.bf16.msra.mxu0 0
    %780 = vmatprep.subr.bf16.mxu0 0
    %781 = vmatpush1.bf16.msra.mxu0 0
    %782 = vmatprep.subr.bf16.mxu0 0
    %783 = vmatpush1.bf16.msra.mxu0 0
    %784 = vmatprep.subr.bf16.mxu0 0
    %785 = vmatpush1.bf16.msra.mxu0 0
    %786 = vmatprep.subr.bf16.mxu0 0
    %787 = vmatpush1.bf16.msra.mxu0 0
    %788 = vmatprep.subr.bf16.mxu0 0
    %789 = vmatpush1.bf16.msra.mxu0 0
    %790 = vmatprep.subr.bf16.mxu0 0
    %791 = vmatpush1.bf16.msra.mxu0 0
    %792 = vmatprep.subr.bf16.mxu0 0
    %793 = vmatpush1.bf16.msra.mxu0 0
    %794 = vmatprep.subr.bf16.mxu0 0
    %795 = vmatpush1.bf16.msra.mxu0 0
    %796 = vmatprep.subr.bf16.mxu0 0
    %797 = vmatpush1.bf16.msra.mxu0 0
    %798 = vmatprep.subr.bf16.mxu0 0
    %799 = vmatpush1.bf16.msra.mxu0 0
    %800 = vmatprep.subr.bf16.mxu0 0
    %801 = vmatpush1.bf16.msra.mxu0 0
    %802 = vmatprep.subr.bf16.mxu0 0
    %803 = vmatpush1.bf16.msra.mxu0 0
    %804 = vmatprep.mubr.bf16.mxu0 0
    %805 = vmatmul.mubr.bf16.gmra.mrb[0].mxu0 %v726
    %v806 = vpop.f32.mrb[0].mxu0
    %v807 = vadd.f32 0.0, %v806
    %v808 = vpop.f32.mrb[0].mxu0
    %v809 = vpop.f32.mrb[0].mxu0
    %v810 = vadd.f32 0.0, %v809
    %v811 = vpop.f32.mrb[0].mxu0
    %812 = vdwg.mxu0
    %v813 = vsub.f32 %v807, %v713
    %v814 = vsub.f32 %v810, %v716
    %v815 = vpack.c.bf16 %v814, %v813
    %v817 = vlaneseq
    %v818 = vshrl.u32 %v817, 7
    %v819 = vsub.s32 0, %v818
    %v820 = vrot.slane %v669, %v819
    %v886 = vunpack.c.l.b16 %v605
    %v887 = vunpack.c.l.b16 %v606
    %v888 = vunpack.c.l.b16 %v607
    %v889 = vunpack.c.l.b16 %v608
    %v890 = vunpack.c.l.b16 %v609
    %v891 = vunpack.c.l.b16 %v610
    %v892 = vunpack.c.l.b16 %v611
    %v893 = vunpack.c.l.b16 %v612
    %v894 = vunpack.c.l.b16 %v613
    %v895 = vunpack.c.l.b16 %v614
    %v896 = vunpack.c.l.b16 %v615
    %v897 = vunpack.c.l.b16 %v616
    %v898 = vunpack.c.l.b16 %v617
    %v899 = vunpack.c.l.b16 %v618
    %v900 = vunpack.c.l.b16 %v619
    %v901 = vunpack.c.l.b16 %v620
    %v902 = vunpack.c.l.b16 %v621
    %v903 = vunpack.c.l.b16 %v622
    %v904 = vunpack.c.l.b16 %v623
    %v905 = vunpack.c.l.b16 %v624
    %v906 = vunpack.c.l.b16 %v625
    %v907 = vunpack.c.l.b16 %v626
    %v908 = vunpack.c.l.b16 %v627
    %v909 = vunpack.c.l.b16 %v628
    %v910 = vunpack.c.l.b16 %v629
    %v911 = vunpack.c.l.b16 %v630
    %v912 = vunpack.c.l.b16 %v631
    %v913 = vunpack.c.l.b16 %v632
    %v914 = vunpack.c.l.b16 %v633
    %v915 = vunpack.c.l.b16 %v634
    %v916 = vunpack.c.l.b16 %v635
    %v917 = vunpack.c.l.b16 %v636
    %v918 = vunpack.c.l.b16 %v637
    %v919 = vunpack.c.l.b16 %v638
    %v920 = vunpack.c.l.b16 %v639
    %v921 = vunpack.c.l.b16 %v640
    %v922 = vunpack.c.l.b16 %v641
    %v923 = vunpack.c.l.b16 %v642
    %v924 = vunpack.c.l.b16 %v643
    %v925 = vunpack.c.l.b16 %v644
    %v926 = vunpack.c.l.b16 %v645
    %v927 = vunpack.c.l.b16 %v646
    %v928 = vunpack.c.l.b16 %v647
    %v929 = vunpack.c.l.b16 %v648
    %v930 = vunpack.c.l.b16 %v649
    %v931 = vunpack.c.l.b16 %v650
    %v932 = vunpack.c.l.b16 %v651
    %v933 = vunpack.c.l.b16 %v652
    %v934 = vunpack.c.l.b16 %v653
    %v935 = vunpack.c.l.b16 %v654
    %v936 = vunpack.c.l.b16 %v655
    %v937 = vunpack.c.l.b16 %v656
    %v938 = vunpack.c.l.b16 %v657
    %v939 = vunpack.c.l.b16 %v658
    %v940 = vunpack.c.l.b16 %v659
    %v941 = vunpack.c.l.b16 %v660
    %v942 = vunpack.c.l.b16 %v661
    %v943 = vunpack.c.l.b16 %v662
    %v944 = vunpack.c.l.b16 %v663
    %v945 = vunpack.c.l.b16 %v664
    %v946 = vunpack.c.l.b16 %v665
    %v947 = vunpack.c.l.b16 %v666
    %v948 = vunpack.c.l.b16 %v667
    %v949 = vunpack.c.l.b16 %v668
    %v950 = vpack.c.b16 %v887, %v886
    %v951 = vpack.c.b16 %v889, %v888
    %v952 = vpack.c.b16 %v891, %v890
    %v953 = vpack.c.b16 %v893, %v892
    %v954 = vpack.c.b16 %v895, %v894
    %v955 = vpack.c.b16 %v897, %v896
    %v956 = vpack.c.b16 %v899, %v898
    %v957 = vpack.c.b16 %v901, %v900
    %v958 = vpack.c.b16 %v903, %v902
    %v959 = vpack.c.b16 %v905, %v904
    %v960 = vpack.c.b16 %v907, %v906
    %v961 = vpack.c.b16 %v909, %v908
    %v962 = vpack.c.b16 %v911, %v910
    %v963 = vpack.c.b16 %v913, %v912
    %v964 = vpack.c.b16 %v915, %v914
    %v965 = vpack.c.b16 %v917, %v916
    %v966 = vpack.c.b16 %v919, %v918
    %v967 = vpack.c.b16 %v921, %v920
    %v968 = vpack.c.b16 %v923, %v922
    %v969 = vpack.c.b16 %v925, %v924
    %v970 = vpack.c.b16 %v927, %v926
    %v971 = vpack.c.b16 %v929, %v928
    %v972 = vpack.c.b16 %v931, %v930
    %v973 = vpack.c.b16 %v933, %v932
    %v974 = vpack.c.b16 %v935, %v934
    %v975 = vpack.c.b16 %v937, %v936
    %v976 = vpack.c.b16 %v939, %v938
    %v977 = vpack.c.b16 %v941, %v940
    %v978 = vpack.c.b16 %v943, %v942
    %v979 = vpack.c.b16 %v945, %v944
    %v980 = vpack.c.b16 %v947, %v946
    %v981 = vpack.c.b16 %v949, %v948
    %1014 = vmatprep.subr.bf16.mxu0 0
    %1015 = vmatpush1.bf16.msra.mxu0 %v950
    %1016 = vmatprep.subr.bf16.mxu0 0
    %1017 = vmatpush1.bf16.msra.mxu0 %v951
    %1018 = vmatprep.subr.bf16.mxu0 0
    %1019 = vmatpush1.bf16.msra.mxu0 %v952
    %1020 = vmatprep.subr.bf16.mxu0 0
    %1021 = vmatpush1.bf16.msra.mxu0 %v953
    %1022 = vmatprep.subr.bf16.mxu0 0
    %1023 = vmatpush1.bf16.msra.mxu0 %v954
    %1024 = vmatprep.subr.bf16.mxu0 0
    %1025 = vmatpush1.bf16.msra.mxu0 %v955
    %1026 = vmatprep.subr.bf16.mxu0 0
    %1027 = vmatpush1.bf16.msra.mxu0 %v956
    %1028 = vmatprep.subr.bf16.mxu0 0
    %1029 = vmatpush1.bf16.msra.mxu0 %v957
    %1030 = vmatprep.subr.bf16.mxu0 0
    %1031 = vmatpush1.bf16.msra.mxu0 %v958
    %1032 = vmatprep.subr.bf16.mxu0 0
    %1033 = vmatpush1.bf16.msra.mxu0 %v959
    %1034 = vmatprep.subr.bf16.mxu0 0
    %1035 = vmatpush1.bf16.msra.mxu0 %v960
    %1036 = vmatprep.subr.bf16.mxu0 0
    %1037 = vmatpush1.bf16.msra.mxu0 %v961
    %1038 = vmatprep.subr.bf16.mxu0 0
    %1039 = vmatpush1.bf16.msra.mxu0 %v962
    %1040 = vmatprep.subr.bf16.mxu0 0
    %1041 = vmatpush1.bf16.msra.mxu0 %v963
    %1042 = vmatprep.subr.bf16.mxu0 0
    %1043 = vmatpush1.bf16.msra.mxu0 %v964
    %1044 = vmatprep.subr.bf16.mxu0 0
    %1045 = vmatpush1.bf16.msra.mxu0 %v965
    %1046 = vmatprep.mubr.bf16.mxu0 %v719
    %1047 = vmatmul.mubr.bf16.gmra.mrb[0].mxu0 %v175
    %v1048 = vpop.f32.mrb[0].mxu0
    %v1049 = vadd.f32 %v820, %v1048
    %v1050 = vpop.f32.mrb[0].mxu0
    %v1051 = vpop.f32.mrb[0].mxu0
    %v1052 = vadd.f32 %v820, %v1051
    %v1053 = vpop.f32.mrb[0].mxu0
    %1054 = vdwg.mxu0
    %1055 = vmatprep.subr.bf16.mxu0 0
    %1056 = vmatpush1.bf16.msra.mxu0 %v966
    %1057 = vmatprep.subr.bf16.mxu0 0
    %1058 = vmatpush1.bf16.msra.mxu0 %v967
    %1059 = vmatprep.subr.bf16.mxu0 0
    %1060 = vmatpush1.bf16.msra.mxu0 %v968
    %1061 = vmatprep.subr.bf16.mxu0 0
    %1062 = vmatpush1.bf16.msra.mxu0 %v969
    %1063 = vmatprep.subr.bf16.mxu0 0
    %1064 = vmatpush1.bf16.msra.mxu0 %v970
    %1065 = vmatprep.subr.bf16.mxu0 0
    %1066 = vmatpush1.bf16.msra.mxu0 %v971
    %1067 = vmatprep.subr.bf16.mxu0 0
    %1068 = vmatpush1.bf16.msra.mxu0 %v972
    %1069 = vmatprep.subr.bf16.mxu0 0
    %1070 = vmatpush1.bf16.msra.mxu0 %v973
    %1071 = vmatprep.subr.bf16.mxu0 0
    %1072 = vmatpush1.bf16.msra.mxu0 %v974
    %1073 = vmatprep.subr.bf16.mxu0 0
    %1074 = vmatpush1.bf16.msra.mxu0 %v975
    %1075 = vmatprep.subr.bf16.mxu0 0
    %1076 = vmatpush1.bf16.msra.mxu0 %v976
    %1077 = vmatprep.subr.bf16.mxu0 0
    %1078 = vmatpush1.bf16.msra.mxu0 %v977
    %1079 = vmatprep.subr.bf16.mxu0 0
    %1080 = vmatpush1.bf16.msra.mxu0 %v978
    %1081 = vmatprep.subr.bf16.mxu0 0
    %1082 = vmatpush1.bf16.msra.mxu0 %v979
    %1083 = vmatprep.subr.bf16.mxu0 0
    %1084 = vmatpush1.bf16.msra.mxu0 %v980
    %1085 = vmatprep.subr.bf16.mxu0 0
    %1086 = vmatpush1.bf16.msra.mxu0 %v981
    %1087 = vmatprep.mubr.bf16.mxu0 %v815
    %1088 = vmatmul.mubr.bf16.gmra.mrb[0].mxu0 %v771
    %v1089 = vpop.f32.mrb[0].mxu0
    %v1090 = vadd.f32 %v1049, %v1089
    %v1091 = vpop.f32.mrb[0].mxu0
    %v1092 = vpop.f32.mrb[0].mxu0
    %v1093 = vadd.f32 %v1052, %v1092
    %v1094 = vpop.f32.mrb[0].mxu0
    %1095 = vdwg.mxu0
    %v1096 = vmax.f32 %v1090, 0.0
    %v1097 = vmax.f32 %v1093, 0.0
    %1100 = vrot.lane.b32.xlu0 %v1096, 64
    %v1101 = vpop.permute.xlu0 %1100
    %1102 = vrot.lane.b32.xlu0 %v1097, 64
    %v1103 = vpop.permute.xlu0 %1102
    %vm1106 = vcmask 523264
    %v1107 = vsel %vm1106, %v603, %v1101
    %v1108 = vsel %vm1106, %v604, %v1103
    %v1109 = vld [vmem:[%s7] sm:$0xff]
    %v1110 = vld [vmem:[%s7 + $0x8] sm:$0xff]
    %v1111 = vld [vmem:[%s7 + $0x10] sm:$0xff]
    %v1112 = vld [vmem:[%s7 + $0x18] sm:$0xff]
    %v1113 = vld [vmem:[%s7 + $0x20] sm:$0xff]
    %v1114 = vld [vmem:[%s7 + $0x28] sm:$0xff]
    %v1115 = vld [vmem:[%s7 + $0x30] sm:$0xff]
    %v1116 = vld [vmem:[%s7 + $0x38] sm:$0xff]
    %v1117 = vld [vmem:[%s7 + $0x40] sm:$0xff]
    %v1118 = vld [vmem:[%s7 + $0x48] sm:$0xff]
    %v1119 = vld [vmem:[%s7 + $0x50] sm:$0xff]
    %v1120 = vld [vmem:[%s7 + $0x58] sm:$0xff]
    %v1121 = vld [vmem:[%s7 + $0x60] sm:$0xff]
    %v1122 = vld [vmem:[%s7 + $0x68] sm:$0xff]
    %v1123 = vld [vmem:[%s7 + $0x70] sm:$0xff]
    %v1124 = vld [vmem:[%s7 + $0x78] sm:$0xff]
    %v1125 = vld [vmem:[%s7 + $0x80] sm:$0xff]
    %v1126 = vld [vmem:[%s7 + $0x88] sm:$0xff]
    %v1127 = vld [vmem:[%s7 + $0x90] sm:$0xff]
    %v1128 = vld [vmem:[%s7 + $0x98] sm:$0xff]
    %v1129 = vld [vmem:[%s7 + $0xa0] sm:$0xff]
    %v1130 = vld [vmem:[%s7 + $0xa8] sm:$0xff]
    %v1131 = vld [vmem:[%s7 + $0xb0] sm:$0xff]
    %v1132 = vld [vmem:[%s7 + $0xb8] sm:$0xff]
    %v1133 = vld [vmem:[%s7 + $0xc0] sm:$0xff]
    %v1134 = vld [vmem:[%s7 + $0xc8] sm:$0xff]
    %v1135 = vld [vmem:[%s7 + $0xd0] sm:$0xff]
    %v1136 = vld [vmem:[%s7 + $0xd8] sm:$0xff]
    %v1137 = vld [vmem:[%s7 + $0xe0] sm:$0xff]
    %v1138 = vld [vmem:[%s7 + $0xe8] sm:$0xff]
    %v1139 = vld [vmem:[%s7 + $0xf0] sm:$0xff]
    %v1140 = vld [vmem:[%s7 + $0xf8] sm:$0xff]
    %v1141 = vld [vmem:[%s7 + $0x100] sm:$0xff]
    %v1142 = vld [vmem:[%s7 + $0x108] sm:$0xff]
    %v1143 = vld [vmem:[%s7 + $0x110] sm:$0xff]
    %v1144 = vld [vmem:[%s7 + $0x118] sm:$0xff]
    %v1145 = vld [vmem:[%s7 + $0x120] sm:$0xff]
    %v1146 = vld [vmem:[%s7 + $0x128] sm:$0xff]
    %v1147 = vld [vmem:[%s7 + $0x130] sm:$0xff]
    %v1148 = vld [vmem:[%s7 + $0x138] sm:$0xff]
    %v1149 = vld [vmem:[%s7 + $0x140] sm:$0xff]
    %v1150 = vld [vmem:[%s7 + $0x148] sm:$0xff]
    %v1151 = vld [vmem:[%s7 + $0x150] sm:$0xff]
    %v1152 = vld [vmem:[%s7 + $0x158] sm:$0xff]
    %v1153 = vld [vmem:[%s7 + $0x160] sm:$0xff]
    %v1154 = vld [vmem:[%s7 + $0x168] sm:$0xff]
    %v1155 = vld [vmem:[%s7 + $0x170] sm:$0xff]
    %v1156 = vld [vmem:[%s7 + $0x178] sm:$0xff]
    %v1157 = vld [vmem:[%s7 + $0x180] sm:$0xff]
    %v1158 = vld [vmem:[%s7 + $0x188] sm:$0xff]
    %v1159 = vld [vmem:[%s7 + $0x190] sm:$0xff]
    %v1160 = vld [vmem:[%s7 + $0x198] sm:$0xff]
    %v1161 = vld [vmem:[%s7 + $0x1a0] sm:$0xff]
    %v1162 = vld [vmem:[%s7 + $0x1a8] sm:$0xff]
    %v1163 = vld [vmem:[%s7 + $0x1b0] sm:$0xff]
    %v1164 = vld [vmem:[%s7 + $0x1b8] sm:$0xff]
    %v1165 = vld [vmem:[%s7 + $0x1c0] sm:$0xff]
    %v1166 = vld [vmem:[%s7 + $0x1c8] sm:$0xff]
    %v1167 = vld [vmem:[%s7 + $0x1d0] sm:$0xff]
    %v1168 = vld [vmem:[%s7 + $0x1d8] sm:$0xff]
    %v1169 = vld [vmem:[%s7 + $0x1e0] sm:$0xff]
    %v1170 = vld [vmem:[%s7 + $0x1e8] sm:$0xff]
    %v1171 = vld [vmem:[%s7 + $0x1f0] sm:$0xff]
    %v1172 = vld [vmem:[%s7 + $0x1f8] sm:$0xff]
    %v1173 = vld [vmem:[%s8] sm:$0x3]
    %v1174 = vpack.c.bf16 %v1108, %v1107
    %1175 = vmatprep.subr.bf16.mxu0 0
    %1176 = vmatpush1.bf16.msra.mxu0 %v1174
    %1177 = vmatprep.subr.bf16.mxu0 0
    %1178 = vmatpush1.bf16.msra.mxu0 0
    %1179 = vmatprep.subr.bf16.mxu0 0
    %1180 = vmatpush1.bf16.msra.mxu0 0
    %1181 = vmatprep.subr.bf16.mxu0 0
    %1182 = vmatpush1.bf16.msra.mxu0 0
    %1183 = vmatprep.subr.bf16.mxu0 0
    %1184 = vmatpush1.bf16.msra.mxu0 0
    %1185 = vmatprep.subr.bf16.mxu0 0
    %1186 = vmatpush1.bf16.msra.mxu0 0
    %1187 = vmatprep.subr.bf16.mxu0 0
    %1188 = vmatpush1.bf16.msra.mxu0 0
    %1189 = vmatprep.subr.bf16.mxu0 0
    %1190 = vmatpush1.bf16.msra.mxu0 0
    %1191 = vmatprep.subr.bf16.mxu0 0
    %1192 = vmatpush1.bf16.msra.mxu0 0
    %1193 = vmatprep.subr.bf16.mxu0 0
    %1194 = vmatpush1.bf16.msra.mxu0 0
    %1195 = vmatprep.subr.bf16.mxu0 0
    %1196 = vmatpush1.bf16.msra.mxu0 0
    %1197 = vmatprep.subr.bf16.mxu0 0
    %1198 = vmatpush1.bf16.msra.mxu0 0
    %1199 = vmatprep.subr.bf16.mxu0 0
    %1200 = vmatpush1.bf16.msra.mxu0 0
    %1201 = vmatprep.subr.bf16.mxu0 0
    %1202 = vmatpush1.bf16.msra.mxu0 0
    %1203 = vmatprep.subr.bf16.mxu0 0
    %1204 = vmatpush1.bf16.msra.mxu0 0
    %1205 = vmatprep.subr.bf16.mxu0 0
    %1206 = vmatpush1.bf16.msra.mxu0 0
    %1207 = vmatprep.mubr.bf16.mxu0 0
    %1208 = vmatmul.mubr.bf16.gmra.mrb[0].mxu0 %v183
    %v1209 = vpop.f32.mrb[0].mxu0
    %v1210 = vadd.f32 0.0, %v1209
    %v1211 = vpop.f32.mrb[0].mxu0
    %v1212 = vpop.f32.mrb[0].mxu0
    %v1213 = vadd.f32 0.0, %v1212
    %v1214 = vpop.f32.mrb[0].mxu0
    %1215 = vdwg.mxu0
    %v1216 = vpack.c.bf16 %v1213, %v1210
    %1217 = vmatprep.subr.bf16.mxu0 0
    %1218 = vmatpush1.bf16.msra.mxu0 %v1216
    %1219 = vmatprep.subr.bf16.mxu0 0
    %1220 = vmatpush1.bf16.msra.mxu0 0
    %1221 = vmatprep.subr.bf16.mxu0 0
    %1222 = vmatpush1.bf16.msra.mxu0 0
    %1223 = vmatprep.subr.bf16.mxu0 0
    %1224 = vmatpush1.bf16.msra.mxu0 0
    %1225 = vmatprep.subr.bf16.mxu0 0
    %1226 = vmatpush1.bf16.msra.mxu0 0
    %1227 = vmatprep.subr.bf16.mxu0 0
    %1228 = vmatpush1.bf16.msra.mxu0 0
    %1229 = vmatprep.subr.bf16.mxu0 0
    %1230 = vmatpush1.bf16.msra.mxu0 0
    %1231 = vmatprep.subr.bf16.mxu0 0
    %1232 = vmatpush1.bf16.msra.mxu0 0
    %1233 = vmatprep.subr.bf16.mxu0 0
    %1234 = vmatpush1.bf16.msra.mxu0 0
    %1235 = vmatprep.subr.bf16.mxu0 0
    %1236 = vmatpush1.bf16.msra.mxu0 0
    %1237 = vmatprep.subr.bf16.mxu0 0
    %1238 = vmatpush1.bf16.msra.mxu0 0
    %1239 = vmatprep.subr.bf16.mxu0 0
    %1240 = vmatpush1.bf16.msra.mxu0 0
    %1241 = vmatprep.subr.bf16.mxu0 0
    %1242 = vmatpush1.bf16.msra.mxu0 0
    %1243 = vmatprep.subr.bf16.mxu0 0
    %1244 = vmatpush1.bf16.msra.mxu0 0
    %1245 = vmatprep.subr.bf16.mxu0 0
    %1246 = vmatpush1.bf16.msra.mxu0 0
    %1247 = vmatprep.subr.bf16.mxu0 0
    %1248 = vmatpush1.bf16.msra.mxu0 0
    %1249 = vmatprep.mubr.bf16.mxu0 0
    %1250 = vmatmul.mubr.bf16.gmra.mrb[0].mxu0 %v233
    %v1251 = vpop.f32.mrb[0].mxu0
    %v1252 = vadd.f32 0.0, %v1251
    %v1253 = vpop.f32.mrb[0].mxu0
    %v1254 = vpop.f32.mrb[0].mxu0
    %v1255 = vadd.f32 0.0, %v1254
    %v1256 = vpop.f32.mrb[0].mxu0
    %1257 = vdwg.mxu0
    %v1258 = vsub.f32 %v1252, %v1107
    %v1259 = vsub.f32 %v1255, %v1108
    %v1260 = vpack.c.bf16 %v1259, %v1258
    %1261 = vmatprep.subr.bf16.mxu0 0
    %1262 = vmatpush1.bf16.msra.mxu0 %v1260
    %1263 = vmatprep.subr.bf16.mxu0 0
    %1264 = vmatpush1.bf16.msra.mxu0 0
    %1265 = vmatprep.subr.bf16.mxu0 0
    %1266 = vmatpush1.bf16.msra.mxu0 0
    %1267 = vmatprep.subr.bf16.mxu0 0
    %1268 = vmatpush1.bf16.msra.mxu0 0
    %1269 = vmatprep.subr.bf16.mxu0 0
    %1270 = vmatpush1.bf16.msra.mxu0 0
    %1271 = vmatprep.subr.bf16.mxu0 0
    %1272 = vmatpush1.bf16.msra.mxu0 0
    %1273 = vmatprep.subr.bf16.mxu0 0
    %1274 = vmatpush1.bf16.msra.mxu0 0
    %1275 = vmatprep.subr.bf16.mxu0 0
    %1276 = vmatpush1.bf16.msra.mxu0 0
    %1277 = vmatprep.subr.bf16.mxu0 0
    %1278 = vmatpush1.bf16.msra.mxu0 0
    %1279 = vmatprep.subr.bf16.mxu0 0
    %1280 = vmatpush1.bf16.msra.mxu0 0
    %1281 = vmatprep.subr.bf16.mxu0 0
    %1282 = vmatpush1.bf16.msra.mxu0 0
    %1283 = vmatprep.subr.bf16.mxu0 0
    %1284 = vmatpush1.bf16.msra.mxu0 0
    %1285 = vmatprep.subr.bf16.mxu0 0
    %1286 = vmatpush1.bf16.msra.mxu0 0
    %1287 = vmatprep.subr.bf16.mxu0 0
    %1288 = vmatpush1.bf16.msra.mxu0 0
    %1289 = vmatprep.subr.bf16.mxu0 0
    %1290 = vmatpush1.bf16.msra.mxu0 0
    %1291 = vmatprep.subr.bf16.mxu0 0
    %1292 = vmatpush1.bf16.msra.mxu0 0
    %1293 = vmatprep.mubr.bf16.mxu0 0
    %1294 = vmatmul.mubr.bf16.gmra.mrb[0].mxu0 %v233
    %v1295 = vpop.f32.mrb[0].mxu0
    %v1296 = vadd.f32 0.0, %v1295
    %v1297 = vpop.f32.mrb[0].mxu0
    %v1298 = vpop.f32.mrb[0].mxu0
    %v1299 = vadd.f32 0.0, %v1298
    %v1300 = vpop.f32.mrb[0].mxu0
    %1301 = vdwg.mxu0
    %v1302 = vsub.f32 %v1296, %v1210
    %v1303 = vsub.f32 %v1299, %v1213
    %v1304 = vpack.c.bf16 %v1303, %v1302
    %v1306 = vlaneseq
    %v1307 = vshrl.u32 %v1306, 7
    %v1308 = vsub.s32 0, %v1307
    %v1309 = vrot.slane %v1173, %v1308
    %v1310 = vlaneseq
    %v1311 = vshrl.u32 %v1310, 7
    %v1312 = vsub.s32 1, %v1311
    %v1313 = vrot.slane %v1173, %v1312
    %v1380 = vunpack.c.l.b16 %v1109
    %v1381 = vunpack.c.h.b16 %v1109
    %v1382 = vunpack.c.l.b16 %v1110
    %v1383 = vunpack.c.h.b16 %v1110
    %v1384 = vunpack.c.l.b16 %v1111
    %v1385 = vunpack.c.h.b16 %v1111
    %v1386 = vunpack.c.l.b16 %v1112
    %v1387 = vunpack.c.h.b16 %v1112
    %v1388 = vunpack.c.l.b16 %v1113
    %v1389 = vunpack.c.h.b16 %v1113
    %v1390 = vunpack.c.l.b16 %v1114
    %v1391 = vunpack.c.h.b16 %v1114
    %v1392 = vunpack.c.l.b16 %v1115
    %v1393 = vunpack.c.h.b16 %v1115
    %v1394 = vunpack.c.l.b16 %v1116
    %v1395 = vunpack.c.h.b16 %v1116
    %v1396 = vunpack.c.l.b16 %v1117
    %v1397 = vunpack.c.h.b16 %v1117
    %v1398 = vunpack.c.l.b16 %v1118
    %v1399 = vunpack.c.h.b16 %v1118
    %v1400 = vunpack.c.l.b16 %v1119
    %v1401 = vunpack.c.h.b16 %v1119
    %v1402 = vunpack.c.l.b16 %v1120
    %v1403 = vunpack.c.h.b16 %v1120
    %v1404 = vunpack.c.l.b16 %v1121
    %v1405 = vunpack.c.h.b16 %v1121
    %v1406 = vunpack.c.l.b16 %v1122
    %v1407 = vunpack.c.h.b16 %v1122
    %v1408 = vunpack.c.l.b16 %v1123
    %v1409 = vunpack.c.h.b16 %v1123
    %v1410 = vunpack.c.l.b16 %v1124
    %v1411 = vunpack.c.h.b16 %v1124
    %v1412 = vunpack.c.l.b16 %v1125
    %v1413 = vunpack.c.h.b16 %v1125
    %v1414 = vunpack.c.l.b16 %v1126
    %v1415 = vunpack.c.h.b16 %v1126
    %v1416 = vunpack.c.l.b16 %v1127
    %v1417 = vunpack.c.h.b16 %v1127
    %v1418 = vunpack.c.l.b16 %v1128
    %v1419 = vunpack.c.h.b16 %v1128
    %v1420 = vunpack.c.l.b16 %v1129
    %v1421 = vunpack.c.h.b16 %v1129
    %v1422 = vunpack.c.l.b16 %v1130
    %v1423 = vunpack.c.h.b16 %v1130
    %v1424 = vunpack.c.l.b16 %v1131
    %v1425 = vunpack.c.h.b16 %v1131
    %v1426 = vunpack.c.l.b16 %v1132
    %v1427 = vunpack.c.h.b16 %v1132
    %v1428 = vunpack.c.l.b16 %v1133
    %v1429 = vunpack.c.h.b16 %v1133
    %v1430 = vunpack.c.l.b16 %v1134
    %v1431 = vunpack.c.h.b16 %v1134
    %v1432 = vunpack.c.l.b16 %v1135
    %v1433 = vunpack.c.h.b16 %v1135
    %v1434 = vunpack.c.l.b16 %v1136
    %v1435 = vunpack.c.h.b16 %v1136
    %v1436 = vunpack.c.l.b16 %v1137
    %v1437 = vunpack.c.h.b16 %v1137
    %v1438 = vunpack.c.l.b16 %v1138
    %v1439 = vunpack.c.h.b16 %v1138
    %v1440 = vunpack.c.l.b16 %v1139
    %v1441 = vunpack.c.h.b16 %v1139
    %v1442 = vunpack.c.l.b16 %v1140
    %v1443 = vunpack.c.h.b16 %v1140
    %v1444 = vunpack.c.l.b16 %v1141
    %v1445 = vunpack.c.h.b16 %v1141
    %v1446 = vunpack.c.l.b16 %v1142
    %v1447 = vunpack.c.h.b16 %v1142
    %v1448 = vunpack.c.l.b16 %v1143
    %v1449 = vunpack.c.h.b16 %v1143
    %v1450 = vunpack.c.l.b16 %v1144
    %v1451 = vunpack.c.h.b16 %v1144
    %v1452 = vunpack.c.l.b16 %v1145
    %v1453 = vunpack.c.h.b16 %v1145
    %v1454 = vunpack.c.l.b16 %v1146
    %v1455 = vunpack.c.h.b16 %v1146
    %v1456 = vunpack.c.l.b16 %v1147
    %v1457 = vunpack.c.h.b16 %v1147
    %v1458 = vunpack.c.l.b16 %v1148
    %v1459 = vunpack.c.h.b16 %v1148
    %v1460 = vunpack.c.l.b16 %v1149
    %v1461 = vunpack.c.h.b16 %v1149
    %v1462 = vunpack.c.l.b16 %v1150
    %v1463 = vunpack.c.h.b16 %v1150
    %v1464 = vunpack.c.l.b16 %v1151
    %v1465 = vunpack.c.h.b16 %v1151
    %v1466 = vunpack.c.l.b16 %v1152
    %v1467 = vunpack.c.h.b16 %v1152
    %v1468 = vunpack.c.l.b16 %v1153
    %v1469 = vunpack.c.h.b16 %v1153
    %v1470 = vunpack.c.l.b16 %v1154
    %v1471 = vunpack.c.h.b16 %v1154
    %v1472 = vunpack.c.l.b16 %v1155
    %v1473 = vunpack.c.h.b16 %v1155
    %v1474 = vunpack.c.l.b16 %v1156
    %v1475 = vunpack.c.h.b16 %v1156
    %v1476 = vunpack.c.l.b16 %v1157
    %v1477 = vunpack.c.h.b16 %v1157
    %v1478 = vunpack.c.l.b16 %v1158
    %v1479 = vunpack.c.h.b16 %v1158
    %v1480 = vunpack.c.l.b16 %v1159
    %v1481 = vunpack.c.h.b16 %v1159
    %v1482 = vunpack.c.l.b16 %v1160
    %v1483 = vunpack.c.h.b16 %v1160
    %v1484 = vunpack.c.l.b16 %v1161
    %v1485 = vunpack.c.h.b16 %v1161
    %v1486 = vunpack.c.l.b16 %v1162
    %v1487 = vunpack.c.h.b16 %v1162
    %v1488 = vunpack.c.l.b16 %v1163
    %v1489 = vunpack.c.h.b16 %v1163
    %v1490 = vunpack.c.l.b16 %v1164
    %v1491 = vunpack.c.h.b16 %v1164
    %v1492 = vunpack.c.l.b16 %v1165
    %v1493 = vunpack.c.h.b16 %v1165
    %v1494 = vunpack.c.l.b16 %v1166
    %v1495 = vunpack.c.h.b16 %v1166
    %v1496 = vunpack.c.l.b16 %v1167
    %v1497 = vunpack.c.h.b16 %v1167
    %v1498 = vunpack.c.l.b16 %v1168
    %v1499 = vunpack.c.h.b16 %v1168
    %v1500 = vunpack.c.l.b16 %v1169
    %v1501 = vunpack.c.h.b16 %v1169
    %v1502 = vunpack.c.l.b16 %v1170
    %v1503 = vunpack.c.h.b16 %v1170
    %v1504 = vunpack.c.l.b16 %v1171
    %v1505 = vunpack.c.h.b16 %v1171
    %v1506 = vunpack.c.l.b16 %v1172
    %v1507 = vunpack.c.h.b16 %v1172
    %v1508 = vpack.c.b16 %v1382, %v1380
    %v1509 = vpack.c.b16 %v1383, %v1381
    %v1510 = vpack.c.b16 %v1386, %v1384
    %v1511 = vpack.c.b16 %v1387, %v1385
    %v1512 = vpack.c.b16 %v1390, %v1388
    %v1513 = vpack.c.b16 %v1391, %v1389
    %v1514 = vpack.c.b16 %v1394, %v1392
    %v1515 = vpack.c.b16 %v1395, %v1393
    %v1516 = vpack.c.b16 %v1398, %v1396
    %v1517 = vpack.c.b16 %v1399, %v1397
    %v1518 = vpack.c.b16 %v1402, %v1400
    %v1519 = vpack.c.b16 %v1403, %v1401
    %v1520 = vpack.c.b16 %v1406, %v1404
    %v1521 = vpack.c.b16 %v1407, %v1405
    %v1522 = vpack.c.b16 %v1410, %v1408
    %v1523 = vpack.c.b16 %v1411, %v1409
    %v1524 = vpack.c.b16 %v1414, %v1412
    %v1525 = vpack.c.b16 %v1415, %v1413
    %v1526 = vpack.c.b16 %v1418, %v1416
    %v1527 = vpack.c.b16 %v1419, %v1417
    %v1528 = vpack.c.b16 %v1422, %v1420
    %v1529 = vpack.c.b16 %v1423, %v1421
    %v1530 = vpack.c.b16 %v1426, %v1424
    %v1531 = vpack.c.b16 %v1427, %v1425
    %v1532 = vpack.c.b16 %v1430, %v1428
    %v1533 = vpack.c.b16 %v1431, %v1429
    %v1534 = vpack.c.b16 %v1434, %v1432
    %v1535 = vpack.c.b16 %v1435, %v1433
    %v1536 = vpack.c.b16 %v1438, %v1436
    %v1537 = vpack.c.b16 %v1439, %v1437
    %v1538 = vpack.c.b16 %v1442, %v1440
    %v1539 = vpack.c.b16 %v1443, %v1441
    %v1540 = vpack.c.b16 %v1446, %v1444
    %v1541 = vpack.c.b16 %v1447, %v1445
    %v1542 = vpack.c.b16 %v1450, %v1448
    %v1543 = vpack.c.b16 %v1451, %v1449
    %v1544 = vpack.c.b16 %v1454, %v1452
    %v1545 = vpack.c.b16 %v1455, %v1453
    %v1546 = vpack.c.b16 %v1458, %v1456
    %v1547 = vpack.c.b16 %v1459, %v1457
    %v1548 = vpack.c.b16 %v1462, %v1460
    %v1549 = vpack.c.b16 %v1463, %v1461
    %v1550 = vpack.c.b16 %v1466, %v1464
    %v1551 = vpack.c.b16 %v1467, %v1465
    %v1552 = vpack.c.b16 %v1470, %v1468
    %v1553 = vpack.c.b16 %v1471, %v1469
    %v1554 = vpack.c.b16 %v1474, %v1472
    %v1555 = vpack.c.b16 %v1475, %v1473
    %v1556 = vpack.c.b16 %v1478, %v1476
    %v1557 = vpack.c.b16 %v1479, %v1477
    %v1558 = vpack.c.b16 %v1482, %v1480
    %v1559 = vpack.c.b16 %v1483, %v1481
    %v1560 = vpack.c.b16 %v1486, %v1484
    %v1561 = vpack.c.b16 %v1487, %v1485
    %v1562 = vpack.c.b16 %v1490, %v1488
    %v1563 = vpack.c.b16 %v1491, %v1489
    %v1564 = vpack.c.b16 %v1494, %v1492
    %v1565 = vpack.c.b16 %v1495, %v1493
    %v1566 = vpack.c.b16 %v1498, %v1496
    %v1567 = vpack.c.b16 %v1499, %v1497
    %v1568 = vpack.c.b16 %v1502, %v1500
    %v1569 = vpack.c.b16 %v1503, %v1501
    %v1570 = vpack.c.b16 %v1506, %v1504
    %v1571 = vpack.c.b16 %v1507, %v1505
    %1636 = vmatprep.subr.bf16.mxu0 %v1509
    %1637 = vmatpush1.bf16.msra.mxu0 %v1508
    %1638 = vmatprep.subr.bf16.mxu0 %v1511
    %1639 = vmatpush1.bf16.msra.mxu0 %v1510
    %1640 = vmatprep.subr.bf16.mxu0 %v1513
    %1641 = vmatpush1.bf16.msra.mxu0 %v1512
    %1642 = vmatprep.subr.bf16.mxu0 %v1515
    %1643 = vmatpush1.bf16.msra.mxu0 %v1514
    %1644 = vmatprep.subr.bf16.mxu0 %v1517
    %1645 = vmatpush1.bf16.msra.mxu0 %v1516
    %1646 = vmatprep.subr.bf16.mxu0 %v1519
    %1647 = vmatpush1.bf16.msra.mxu0 %v1518
    %1648 = vmatprep.subr.bf16.mxu0 %v1521
    %1649 = vmatpush1.bf16.msra.mxu0 %v1520
    %1650 = vmatprep.subr.bf16.mxu0 %v1523
    %1651 = vmatpush1.bf16.msra.mxu0 %v1522
    %1652 = vmatprep.subr.bf16.mxu0 %v1525
    %1653 = vmatpush1.bf16.msra.mxu0 %v1524
    %1654 = vmatprep.subr.bf16.mxu0 %v1527
    %1655 = vmatpush1.bf16.msra.mxu0 %v1526
    %1656 = vmatprep.subr.bf16.mxu0 %v1529
    %1657 = vmatpush1.bf16.msra.mxu0 %v1528
    %1658 = vmatprep.subr.bf16.mxu0 %v1531
    %1659 = vmatpush1.bf16.msra.mxu0 %v1530
    %1660 = vmatprep.subr.bf16.mxu0 %v1533
    %1661 = vmatpush1.bf16.msra.mxu0 %v1532
    %1662 = vmatprep.subr.bf16.mxu0 %v1535
    %1663 = vmatpush1.bf16.msra.mxu0 %v1534
    %1664 = vmatprep.subr.bf16.mxu0 %v1537
    %1665 = vmatpush1.bf16.msra.mxu0 %v1536
    %1666 = vmatprep.subr.bf16.mxu0 %v1539
    %1667 = vmatpush1.bf16.msra.mxu0 %v1538
    %1668 = vmatprep.mubr.bf16.mxu0 %v1216
    %1669 = vmatmul.mubr.bf16.gmra.mrb[0].mxu0 %v1174
    %v1670 = vpop.f32.mrb[0].mxu0
    %v1671 = vadd.f32 %v1309, %v1670
    %v1672 = vpop.f32.mrb[0].mxu0
    %v1673 = vadd.f32 %v1313, %v1672
    %v1674 = vpop.f32.mrb[0].mxu0
    %v1675 = vadd.f32 %v1309, %v1674
    %v1676 = vpop.f32.mrb[0].mxu0
    %v1677 = vadd.f32 %v1313, %v1676
    %1678 = vdwg.mxu0
    %1679 = vmatprep.subr.bf16.mxu0 %v1541
    %1680 = vmatpush1.bf16.msra.mxu0 %v1540
    %1681 = vmatprep.subr.bf16.mxu0 %v1543
    %1682 = vmatpush1.bf16.msra.mxu0 %v1542
    %1683 = vmatprep.subr.bf16.mxu0 %v1545
    %1684 = vmatpush1.bf16.msra.mxu0 %v1544
    %1685 = vmatprep.subr.bf16.mxu0 %v1547
    %1686 = vmatpush1.bf16.msra.mxu0 %v1546
    %1687 = vmatprep.subr.bf16.mxu0 %v1549
    %1688 = vmatpush1.bf16.msra.mxu0 %v1548
    %1689 = vmatprep.subr.bf16.mxu0 %v1551
    %1690 = vmatpush1.bf16.msra.mxu0 %v1550
    %1691 = vmatprep.subr.bf16.mxu0 %v1553
    %1692 = vmatpush1.bf16.msra.mxu0 %v1552
    %1693 = vmatprep.subr.bf16.mxu0 %v1555
    %1694 = vmatpush1.bf16.msra.mxu0 %v1554
    %1695 = vmatprep.subr.bf16.mxu0 %v1557
    %1696 = vmatpush1.bf16.msra.mxu0 %v1556
    %1697 = vmatprep.subr.bf16.mxu0 %v1559
    %1698 = vmatpush1.bf16.msra.mxu0 %v1558
    %1699 = vmatprep.subr.bf16.mxu0 %v1561
    %1700 = vmatpush1.bf16.msra.mxu0 %v1560
    %1701 = vmatprep.subr.bf16.mxu0 %v1563
    %1702 = vmatpush1.bf16.msra.mxu0 %v1562
    %1703 = vmatprep.subr.bf16.mxu0 %v1565
    %1704 = vmatpush1.bf16.msra.mxu0 %v1564
    %1705 = vmatprep.subr.bf16.mxu0 %v1567
    %1706 = vmatpush1.bf16.msra.mxu0 %v1566
    %1707 = vmatprep.subr.bf16.mxu0 %v1569
    %1708 = vmatpush1.bf16.msra.mxu0 %v1568
    %1709 = vmatprep.subr.bf16.mxu0 %v1571
    %1710 = vmatpush1.bf16.msra.mxu0 %v1570
    %1711 = vmatprep.mubr.bf16.mxu0 %v1304
    %1712 = vmatmul.mubr.bf16.gmra.mrb[0].mxu0 %v1260
    %v1713 = vpop.f32.mrb[0].mxu0
    %v1714 = vadd.f32 %v1671, %v1713
    %v1715 = vpop.f32.mrb[0].mxu0
    %v1716 = vadd.f32 %v1673, %v1715
    %v1717 = vpop.f32.mrb[0].mxu0
    %v1718 = vadd.f32 %v1675, %v1717
    %v1719 = vpop.f32.mrb[0].mxu0
    %v1720 = vadd.f32 %v1677, %v1719
    %1721 = vdwg.mxu0
    %v1722 = vmax.f32 %v1714, 0.0
    %v1723 = vmax.f32 %v1716, 0.0
    %v1724 = vmax.f32 %v1718, 0.0
    %v1725 = vmax.f32 %v1720, 0.0
    %v1726 = vld [vmem:[#allocation8] sm:$0xff]
    %v1727 = vld [vmem:[#allocation8 + $0x8] sm:$0xff]
    %v1728 = vld [vmem:[#allocation8 + $0x10] sm:$0xff]
    %v1729 = vld [vmem:[#allocation8 + $0x18] sm:$0xff]
    %v1730 = vld [vmem:[#allocation8 + $0x20] sm:$0xff]
    %v1731 = vld [vmem:[#allocation8 + $0x28] sm:$0xff]
    %v1732 = vld [vmem:[#allocation8 + $0x30] sm:$0xff]
    %v1733 = vld [vmem:[#allocation8 + $0x38] sm:$0xff]
    %v1734 = vld [vmem:[#allocation8 + $0x40] sm:$0xff]
    %v1735 = vld [vmem:[#allocation8 + $0x48] sm:$0xff]
    %v1736 = vld [vmem:[#allocation8 + $0x50] sm:$0xff]
    %v1737 = vld [vmem:[#allocation8 + $0x58] sm:$0xff]
    %v1738 = vld [vmem:[#allocation8 + $0x60] sm:$0xff]
    %v1739 = vld [vmem:[#allocation8 + $0x68] sm:$0xff]
    %v1740 = vld [vmem:[#allocation8 + $0x70] sm:$0xff]
    %v1741 = vld [vmem:[#allocation8 + $0x78] sm:$0xff]
    %v1742 = vld [vmem:[#allocation8 + $0x80] sm:$0xff]
    %v1743 = vld [vmem:[#allocation8 + $0x88] sm:$0xff]
    %v1744 = vld [vmem:[#allocation8 + $0x90] sm:$0xff]
    %v1745 = vld [vmem:[#allocation8 + $0x98] sm:$0xff]
    %v1746 = vld [vmem:[#allocation8 + $0xa0] sm:$0xff]
    %v1747 = vld [vmem:[#allocation8 + $0xa8] sm:$0xff]
    %v1748 = vld [vmem:[#allocation8 + $0xb0] sm:$0xff]
    %v1749 = vld [vmem:[#allocation8 + $0xb8] sm:$0xff]
    %v1750 = vld [vmem:[#allocation8 + $0xc0] sm:$0xff]
    %v1751 = vld [vmem:[#allocation8 + $0xc8] sm:$0xff]
    %v1752 = vld [vmem:[#allocation8 + $0xd0] sm:$0xff]
    %v1753 = vld [vmem:[#allocation8 + $0xd8] sm:$0xff]
    %v1754 = vld [vmem:[#allocation8 + $0xe0] sm:$0xff]
    %v1755 = vld [vmem:[#allocation8 + $0xe8] sm:$0xff]
    %v1756 = vld [vmem:[#allocation8 + $0xf0] sm:$0xff]
    %v1757 = vld [vmem:[#allocation8 + $0xf8] sm:$0xff]
    %v1758 = vld [vmem:[#allocation8 + $0x100] sm:$0xff]
    %v1759 = vld [vmem:[#allocation8 + $0x108] sm:$0xff]
    %v1760 = vld [vmem:[#allocation8 + $0x110] sm:$0xff]
    %v1761 = vld [vmem:[#allocation8 + $0x118] sm:$0xff]
    %v1762 = vld [vmem:[#allocation8 + $0x120] sm:$0xff]
    %v1763 = vld [vmem:[#allocation8 + $0x128] sm:$0xff]
    %v1764 = vld [vmem:[#allocation8 + $0x130] sm:$0xff]
    %v1765 = vld [vmem:[#allocation8 + $0x138] sm:$0xff]
    %v1766 = vld [vmem:[#allocation8 + $0x140] sm:$0xff]
    %v1767 = vld [vmem:[#allocation8 + $0x148] sm:$0xff]
    %v1768 = vld [vmem:[#allocation8 + $0x150] sm:$0xff]
    %v1769 = vld [vmem:[#allocation8 + $0x158] sm:$0xff]
    %v1770 = vld [vmem:[#allocation8 + $0x160] sm:$0xff]
    %v1771 = vld [vmem:[#allocation8 + $0x168] sm:$0xff]
    %v1772 = vld [vmem:[#allocation8 + $0x170] sm:$0xff]
    %v1773 = vld [vmem:[#allocation8 + $0x178] sm:$0xff]
    %v1774 = vld [vmem:[#allocation8 + $0x180] sm:$0xff]
    %v1775 = vld [vmem:[#allocation8 + $0x188] sm:$0xff]
    %v1776 = vld [vmem:[#allocation8 + $0x190] sm:$0xff]
    %v1777 = vld [vmem:[#allocation8 + $0x198] sm:$0xff]
    %v1778 = vld [vmem:[#allocation8 + $0x1a0] sm:$0xff]
    %v1779 = vld [vmem:[#allocation8 + $0x1a8] sm:$0xff]
    %v1780 = vld [vmem:[#allocation8 + $0x1b0] sm:$0xff]
    %v1781 = vld [vmem:[#allocation8 + $0x1b8] sm:$0xff]
    %v1782 = vld [vmem:[#allocation8 + $0x1c0] sm:$0xff]
    %v1783 = vld [vmem:[#allocation8 + $0x1c8] sm:$0xff]
    %v1784 = vld [vmem:[#allocation8 + $0x1d0] sm:$0xff]
    %v1785 = vld [vmem:[#allocation8 + $0x1d8] sm:$0xff]
    %v1786 = vld [vmem:[#allocation8 + $0x1e0] sm:$0xff]
    %v1787 = vld [vmem:[#allocation8 + $0x1e8] sm:$0xff]
    %v1788 = vld [vmem:[#allocation8 + $0x1f0] sm:$0xff]
    %v1789 = vld [vmem:[#allocation8 + $0x1f8] sm:$0xff]
    %v1790 = vld [vmem:[%s10] sm:$0x3]
    %1791 = vmatprep.subr.bf16.mxu0 0
    %1792 = vmatpush1.bf16.msra.mxu0 %v1174
    %1793 = vmatprep.subr.bf16.mxu0 0
    %1794 = vmatpush1.bf16.msra.mxu0 0
    %1795 = vmatprep.subr.bf16.mxu0 0
    %1796 = vmatpush1.bf16.msra.mxu0 0
    %1797 = vmatprep.subr.bf16.mxu0 0
    %1798 = vmatpush1.bf16.msra.mxu0 0
    %1799 = vmatprep.subr.bf16.mxu0 0
    %1800 = vmatpush1.bf16.msra.mxu0 0
    %1801 = vmatprep.subr.bf16.mxu0 0
    %1802 = vmatpush1.bf16.msra.mxu0 0
    %1803 = vmatprep.subr.bf16.mxu0 0
    %1804 = vmatpush1.bf16.msra.mxu0 0
    %1805 = vmatprep.subr.bf16.mxu0 0
    %1806 = vmatpush1.bf16.msra.mxu0 0
    %1807 = vmatprep.subr.bf16.mxu0 0
    %1808 = vmatpush1.bf16.msra.mxu0 0
    %1809 = vmatprep.subr.bf16.mxu0 0
    %1810 = vmatpush1.bf16.msra.mxu0 0
    %1811 = vmatprep.subr.bf16.mxu0 0
    %1812 = vmatpush1.bf16.msra.mxu0 0
    %1813 = vmatprep.subr.bf16.mxu0 0
    %1814 = vmatpush1.bf16.msra.mxu0 0
    %1815 = vmatprep.subr.bf16.mxu0 0
    %1816 = vmatpush1.bf16.msra.mxu0 0
    %1817 = vmatprep.subr.bf16.mxu0 0
    %1818 = vmatpush1.bf16.msra.mxu0 0
    %1819 = vmatprep.subr.bf16.mxu0 0
    %1820 = vmatpush1.bf16.msra.mxu0 0
    %1821 = vmatprep.subr.bf16.mxu0 0
    %1822 = vmatpush1.bf16.msra.mxu0 0
    %1823 = vmatprep.mubr.bf16.mxu0 0
    %1824 = vmatmul.mubr.bf16.gmra.mrb[0].mxu0 %v676
    %v1825 = vpop.f32.mrb[0].mxu0
    %v1826 = vadd.f32 0.0, %v1825
    %v1827 = vpop.f32.mrb[0].mxu0
    %v1828 = vpop.f32.mrb[0].mxu0
    %v1829 = vadd.f32 0.0, %v1828
    %v1830 = vpop.f32.mrb[0].mxu0
    %1831 = vdwg.mxu0
    %v1832 = vpack.c.bf16 %v1829, %v1826
    %1833 = vmatprep.subr.bf16.mxu0 0
    %1834 = vmatpush1.bf16.msra.mxu0 %v1832
    %1835 = vmatprep.subr.bf16.mxu0 0
    %1836 = vmatpush1.bf16.msra.mxu0 0
    %1837 = vmatprep.subr.bf16.mxu0 0
    %1838 = vmatpush1.bf16.msra.mxu0 0
    %1839 = vmatprep.subr.bf16.mxu0 0
    %1840 = vmatpush1.bf16.msra.mxu0 0
    %1841 = vmatprep.subr.bf16.mxu0 0
    %1842 = vmatpush1.bf16.msra.mxu0 0
    %1843 = vmatprep.subr.bf16.mxu0 0
    %1844 = vmatpush1.bf16.msra.mxu0 0
    %1845 = vmatprep.subr.bf16.mxu0 0
    %1846 = vmatpush1.bf16.msra.mxu0 0
    %1847 = vmatprep.subr.bf16.mxu0 0
    %1848 = vmatpush1.bf16.msra.mxu0 0
    %1849 = vmatprep.subr.bf16.mxu0 0
    %1850 = vmatpush1.bf16.msra.mxu0 0
    %1851 = vmatprep.subr.bf16.mxu0 0
    %1852 = vmatpush1.bf16.msra.mxu0 0
    %1853 = vmatprep.subr.bf16.mxu0 0
    %1854 = vmatpush1.bf16.msra.mxu0 0
    %1855 = vmatprep.subr.bf16.mxu0 0
    %1856 = vmatpush1.bf16.msra.mxu0 0
    %1857 = vmatprep.subr.bf16.mxu0 0
    %1858 = vmatpush1.bf16.msra.mxu0 0
    %1859 = vmatprep.subr.bf16.mxu0 0
    %1860 = vmatpush1.bf16.msra.mxu0 0
    %1861 = vmatprep.subr.bf16.mxu0 0
    %1862 = vmatpush1.bf16.msra.mxu0 0
    %1863 = vmatprep.subr.bf16.mxu0 0
    %1864 = vmatpush1.bf16.msra.mxu0 0
    %1865 = vmatprep.mubr.bf16.mxu0 0
    %1866 = vmatmul.mubr.bf16.gmra.mrb[0].mxu0 %v726
    %v1867 = vpop.f32.mrb[0].mxu0
    %v1868 = vadd.f32 0.0, %v1867
    %v1869 = vpop.f32.mrb[0].mxu0
    %v1870 = vpop.f32.mrb[0].mxu0
    %v1871 = vadd.f32 0.0, %v1870
    %v1872 = vpop.f32.mrb[0].mxu0
    %1873 = vdwg.mxu0
    %v1874 = vsub.f32 %v1868, %v1107
    %v1875 = vsub.f32 %v1871, %v1108
    %v1876 = vpack.c.bf16 %v1875, %v1874
    %1877 = vmatprep.subr.bf16.mxu0 0
    %1878 = vmatpush1.bf16.msra.mxu0 %v1876
    %1879 = vmatprep.subr.bf16.mxu0 0
    %1880 = vmatpush1.bf16.msra.mxu0 0
    %1881 = vmatprep.subr.bf16.mxu0 0
    %1882 = vmatpush1.bf16.msra.mxu0 0
    %1883 = vmatprep.subr.bf16.mxu0 0
    %1884 = vmatpush1.bf16.msra.mxu0 0
    %1885 = vmatprep.subr.bf16.mxu0 0
    %1886 = vmatpush1.bf16.msra.mxu0 0
    %1887 = vmatprep.subr.bf16.mxu0 0
    %1888 = vmatpush1.bf16.msra.mxu0 0
    %1889 = vmatprep.subr.bf16.mxu0 0
    %1890 = vmatpush1.bf16.msra.mxu0 0
    %1891 = vmatprep.subr.bf16.mxu0 0
    %1892 = vmatpush1.bf16.msra.mxu0 0
    %1893 = vmatprep.subr.bf16.mxu0 0
    %1894 = vmatpush1.bf16.msra.mxu0 0
    %1895 = vmatprep.subr.bf16.mxu0 0
    %1896 = vmatpush1.bf16.msra.mxu0 0
    %1897 = vmatprep.subr.bf16.mxu0 0
    %1898 = vmatpush1.bf16.msra.mxu0 0
    %1899 = vmatprep.subr.bf16.mxu0 0
    %1900 = vmatpush1.bf16.msra.mxu0 0
    %1901 = vmatprep.subr.bf16.mxu0 0
    %1902 = vmatpush1.bf16.msra.mxu0 0
    %1903 = vmatprep.subr.bf16.mxu0 0
    %1904 = vmatpush1.bf16.msra.mxu0 0
    %1905 = vmatprep.subr.bf16.mxu0 0
    %1906 = vmatpush1.bf16.msra.mxu0 0
    %1907 = vmatprep.subr.bf16.mxu0 0
    %1908 = vmatpush1.bf16.msra.mxu0 0
    %1909 = vmatprep.mubr.bf16.mxu0 0
    %1910 = vmatmul.mubr.bf16.gmra.mrb[0].mxu0 %v726
    %v1911 = vpop.f32.mrb[0].mxu0
    %v1912 = vadd.f32 0.0, %v1911
    %v1913 = vpop.f32.mrb[0].mxu0
    %v1914 = vpop.f32.mrb[0].mxu0
    %v1915 = vadd.f32 0.0, %v1914
    %v1916 = vpop.f32.mrb[0].mxu0
    %1917 = vdwg.mxu0
    %v1918 = vsub.f32 %v1912, %v1826
    %v1919 = vsub.f32 %v1915, %v1829
    %v1920 = vpack.c.bf16 %v1919, %v1918
    %v1922 = vlaneseq
    %v1923 = vshrl.u32 %v1922, 7
    %v1924 = vsub.s32 0, %v1923
    %v1925 = vrot.slane %v1790, %v1924
    %v1926 = vlaneseq
    %v1927 = vshrl.u32 %v1926, 7
    %v1928 = vsub.s32 1, %v1927
    %v1929 = vrot.slane %v1790, %v1928
    %v1996 = vunpack.c.l.b16 %v1726
    %v1997 = vunpack.c.h.b16 %v1726
    %v1998 = vunpack.c.l.b16 %v1727
    %v1999 = vunpack.c.h.b16 %v1727
    %v2000 = vunpack.c.l.b16 %v1728
    %v2001 = vunpack.c.h.b16 %v1728
    %v2002 = vunpack.c.l.b16 %v1729
    %v2003 = vunpack.c.h.b16 %v1729
    %v2004 = vunpack.c.l.b16 %v1730
    %v2005 = vunpack.c.h.b16 %v1730
    %v2006 = vunpack.c.l.b16 %v1731
    %v2007 = vunpack.c.h.b16 %v1731
    %v2008 = vunpack.c.l.b16 %v1732
    %v2009 = vunpack.c.h.b16 %v1732
    %v2010 = vunpack.c.l.b16 %v1733
    %v2011 = vunpack.c.h.b16 %v1733
    %v2012 = vunpack.c.l.b16 %v1734
    %v2013 = vunpack.c.h.b16 %v1734
    %v2014 = vunpack.c.l.b16 %v1735
    %v2015 = vunpack.c.h.b16 %v1735
    %v2016 = vunpack.c.l.b16 %v1736
    %v2017 = vunpack.c.h.b16 %v1736
    %v2018 = vunpack.c.l.b16 %v1737
    %v2019 = vunpack.c.h.b16 %v1737
    %v2020 = vunpack.c.l.b16 %v1738
    %v2021 = vunpack.c.h.b16 %v1738
    %v2022 = vunpack.c.l.b16 %v1739
    %v2023 = vunpack.c.h.b16 %v1739
    %v2024 = vunpack.c.l.b16 %v1740
    %v2025 = vunpack.c.h.b16 %v1740
    %v2026 = vunpack.c.l.b16 %v1741
    %v2027 = vunpack.c.h.b16 %v1741
    %v2028 = vunpack.c.l.b16 %v1742
    %v2029 = vunpack.c.h.b16 %v1742
    %v2030 = vunpack.c.l.b16 %v1743
    %v2031 = vunpack.c.h.b16 %v1743
    %v2032 = vunpack.c.l.b16 %v1744
    %v2033 = vunpack.c.h.b16 %v1744
    %v2034 = vunpack.c.l.b16 %v1745
    %v2035 = vunpack.c.h.b16 %v1745
    %v2036 = vunpack.c.l.b16 %v1746
    %v2037 = vunpack.c.h.b16 %v1746
    %v2038 = vunpack.c.l.b16 %v1747
    %v2039 = vunpack.c.h.b16 %v1747
    %v2040 = vunpack.c.l.b16 %v1748
    %v2041 = vunpack.c.h.b16 %v1748
    %v2042 = vunpack.c.l.b16 %v1749
    %v2043 = vunpack.c.h.b16 %v1749
    %v2044 = vunpack.c.l.b16 %v1750
    %v2045 = vunpack.c.h.b16 %v1750
    %v2046 = vunpack.c.l.b16 %v1751
    %v2047 = vunpack.c.h.b16 %v1751
    %v2048 = vunpack.c.l.b16 %v1752
    %v2049 = vunpack.c.h.b16 %v1752
    %v2050 = vunpack.c.l.b16 %v1753
    %v2051 = vunpack.c.h.b16 %v1753
    %v2052 = vunpack.c.l.b16 %v1754
    %v2053 = vunpack.c.h.b16 %v1754
    %v2054 = vunpack.c.l.b16 %v1755
    %v2055 = vunpack.c.h.b16 %v1755
    %v2056 = vunpack.c.l.b16 %v1756
    %v2057 = vunpack.c.h.b16 %v1756
    %v2058 = vunpack.c.l.b16 %v1757
    %v2059 = vunpack.c.h.b16 %v1757
    %v2060 = vunpack.c.l.b16 %v1758
    %v2061 = vunpack.c.h.b16 %v1758
    %v2062 = vunpack.c.l.b16 %v1759
    %v2063 = vunpack.c.h.b16 %v1759
    %v2064 = vunpack.c.l.b16 %v1760
    %v2065 = vunpack.c.h.b16 %v1760
    %v2066 = vunpack.c.l.b16 %v1761
    %v2067 = vunpack.c.h.b16 %v1761
    %v2068 = vunpack.c.l.b16 %v1762
    %v2069 = vunpack.c.h.b16 %v1762
    %v2070 = vunpack.c.l.b16 %v1763
    %v2071 = vunpack.c.h.b16 %v1763
    %v2072 = vunpack.c.l.b16 %v1764
    %v2073 = vunpack.c.h.b16 %v1764
    %v2074 = vunpack.c.l.b16 %v1765
    %v2075 = vunpack.c.h.b16 %v1765
    %v2076 = vunpack.c.l.b16 %v1766
    %v2077 = vunpack.c.h.b16 %v1766
    %v2078 = vunpack.c.l.b16 %v1767
    %v2079 = vunpack.c.h.b16 %v1767
    %v2080 = vunpack.c.l.b16 %v1768
    %v2081 = vunpack.c.h.b16 %v1768
    %v2082 = vunpack.c.l.b16 %v1769
    %v2083 = vunpack.c.h.b16 %v1769
    %v2084 = vunpack.c.l.b16 %v1770
    %v2085 = vunpack.c.h.b16 %v1770
    %v2086 = vunpack.c.l.b16 %v1771
    %v2087 = vunpack.c.h.b16 %v1771
    %v2088 = vunpack.c.l.b16 %v1772
    %v2089 = vunpack.c.h.b16 %v1772
    %v2090 = vunpack.c.l.b16 %v1773
    %v2091 = vunpack.c.h.b16 %v1773
    %v2092 = vunpack.c.l.b16 %v1774
    %v2093 = vunpack.c.h.b16 %v1774
    %v2094 = vunpack.c.l.b16 %v1775
    %v2095 = vunpack.c.h.b16 %v1775
    %v2096 = vunpack.c.l.b16 %v1776
    %v2097 = vunpack.c.h.b16 %v1776
    %v2098 = vunpack.c.l.b16 %v1777
    %v2099 = vunpack.c.h.b16 %v1777
    %v2100 = vunpack.c.l.b16 %v1778
    %v2101 = vunpack.c.h.b16 %v1778
    %v2102 = vunpack.c.l.b16 %v1779
    %v2103 = vunpack.c.h.b16 %v1779
    %v2104 = vunpack.c.l.b16 %v1780
    %v2105 = vunpack.c.h.b16 %v1780
    %v2106 = vunpack.c.l.b16 %v1781
    %v2107 = vunpack.c.h.b16 %v1781
    %v2108 = vunpack.c.l.b16 %v1782
    %v2109 = vunpack.c.h.b16 %v1782
    %v2110 = vunpack.c.l.b16 %v1783
    %v2111 = vunpack.c.h.b16 %v1783
    %v2112 = vunpack.c.l.b16 %v1784
    %v2113 = vunpack.c.h.b16 %v1784
    %v2114 = vunpack.c.l.b16 %v1785
    %v2115 = vunpack.c.h.b16 %v1785
    %v2116 = vunpack.c.l.b16 %v1786
    %v2117 = vunpack.c.h.b16 %v1786
    %v2118 = vunpack.c.l.b16 %v1787
    %v2119 = vunpack.c.h.b16 %v1787
    %v2120 = vunpack.c.l.b16 %v1788
    %v2121 = vunpack.c.h.b16 %v1788
    %v2122 = vunpack.c.l.b16 %v1789
    %v2123 = vunpack.c.h.b16 %v1789
    %v2124 = vpack.c.b16 %v1998, %v1996
    %v2125 = vpack.c.b16 %v1999, %v1997
    %v2126 = vpack.c.b16 %v2002, %v2000
    %v2127 = vpack.c.b16 %v2003, %v2001
    %v2128 = vpack.c.b16 %v2006, %v2004
    %v2129 = vpack.c.b16 %v2007, %v2005
    %v2130 = vpack.c.b16 %v2010, %v2008
    %v2131 = vpack.c.b16 %v2011, %v2009
    %v2132 = vpack.c.b16 %v2014, %v2012
    %v2133 = vpack.c.b16 %v2015, %v2013
    %v2134 = vpack.c.b16 %v2018, %v2016
    %v2135 = vpack.c.b16 %v2019, %v2017
    %v2136 = vpack.c.b16 %v2022, %v2020
    %v2137 = vpack.c.b16 %v2023, %v2021
    %v2138 = vpack.c.b16 %v2026, %v2024
    %v2139 = vpack.c.b16 %v2027, %v2025
    %v2140 = vpack.c.b16 %v2030, %v2028
    %v2141 = vpack.c.b16 %v2031, %v2029
    %v2142 = vpack.c.b16 %v2034, %v2032
    %v2143 = vpack.c.b16 %v2035, %v2033
    %v2144 = vpack.c.b16 %v2038, %v2036
    %v2145 = vpack.c.b16 %v2039, %v2037
    %v2146 = vpack.c.b16 %v2042, %v2040
    %v2147 = vpack.c.b16 %v2043, %v2041
    %v2148 = vpack.c.b16 %v2046, %v2044
    %v2149 = vpack.c.b16 %v2047, %v2045
    %v2150 = vpack.c.b16 %v2050, %v2048
    %v2151 = vpack.c.b16 %v2051, %v2049
    %v2152 = vpack.c.b16 %v2054, %v2052
    %v2153 = vpack.c.b16 %v2055, %v2053
    %v2154 = vpack.c.b16 %v2058, %v2056
    %v2155 = vpack.c.b16 %v2059, %v2057
    %v2156 = vpack.c.b16 %v2062, %v2060
    %v2157 = vpack.c.b16 %v2063, %v2061
    %v2158 = vpack.c.b16 %v2066, %v2064
    %v2159 = vpack.c.b16 %v2067, %v2065
    %v2160 = vpack.c.b16 %v2070, %v2068
    %v2161 = vpack.c.b16 %v2071, %v2069
    %v2162 = vpack.c.b16 %v2074, %v2072
    %v2163 = vpack.c.b16 %v2075, %v2073
    %v2164 = vpack.c.b16 %v2078, %v2076
    %v2165 = vpack.c.b16 %v2079, %v2077
    %v2166 = vpack.c.b16 %v2082, %v2080
    %v2167 = vpack.c.b16 %v2083, %v2081
    %v2168 = vpack.c.b16 %v2086, %v2084
    %v2169 = vpack.c.b16 %v2087, %v2085
    %v2170 = vpack.c.b16 %v2090, %v2088
    %v2171 = vpack.c.b16 %v2091, %v2089
    %v2172 = vpack.c.b16 %v2094, %v2092
    %v2173 = vpack.c.b16 %v2095, %v2093
    %v2174 = vpack.c.b16 %v2098, %v2096
    %v2175 = vpack.c.b16 %v2099, %v2097
    %v2176 = vpack.c.b16 %v2102, %v2100
    %v2177 = vpack.c.b16 %v2103, %v2101
    %v2178 = vpack.c.b16 %v2106, %v2104
    %v2179 = vpack.c.b16 %v2107, %v2105
    %v2180 = vpack.c.b16 %v2110, %v2108
    %v2181 = vpack.c.b16 %v2111, %v2109
    %v2182 = vpack.c.b16 %v2114, %v2112
    %v2183 = vpack.c.b16 %v2115, %v2113
    %v2184 = vpack.c.b16 %v2118, %v2116
    %v2185 = vpack.c.b16 %v2119, %v2117
    %v2186 = vpack.c.b16 %v2122, %v2120
    %v2187 = vpack.c.b16 %v2123, %v2121
    %2252 = vmatprep.subr.bf16.mxu0 %v2125
    %2253 = vmatpush1.bf16.msra.mxu0 %v2124
    %2254 = vmatprep.subr.bf16.mxu0 %v2127
    %2255 = vmatpush1.bf16.msra.mxu0 %v2126
    %2256 = vmatprep.subr.bf16.mxu0 %v2129
    %2257 = vmatpush1.bf16.msra.mxu0 %v2128
    %2258 = vmatprep.subr.bf16.mxu0 %v2131
    %2259 = vmatpush1.bf16.msra.mxu0 %v2130
    %2260 = vmatprep.subr.bf16.mxu0 %v2133
    %2261 = vmatpush1.bf16.msra.mxu0 %v2132
    %2262 = vmatprep.subr.bf16.mxu0 %v2135
    %2263 = vmatpush1.bf16.msra.mxu0 %v2134
    %2264 = vmatprep.subr.bf16.mxu0 %v2137
    %2265 = vmatpush1.bf16.msra.mxu0 %v2136
    %2266 = vmatprep.subr.bf16.mxu0 %v2139
    %2267 = vmatpush1.bf16.msra.mxu0 %v2138
    %2268 = vmatprep.subr.bf16.mxu0 %v2141
    %2269 = vmatpush1.bf16.msra.mxu0 %v2140
    %2270 = vmatprep.subr.bf16.mxu0 %v2143
    %2271 = vmatpush1.bf16.msra.mxu0 %v2142
    %2272 = vmatprep.subr.bf16.mxu0 %v2145
    %2273 = vmatpush1.bf16.msra.mxu0 %v2144
    %2274 = vmatprep.subr.bf16.mxu0 %v2147
    %2275 = vmatpush1.bf16.msra.mxu0 %v2146
    %2276 = vmatprep.subr.bf16.mxu0 %v2149
    %2277 = vmatpush1.bf16.msra.mxu0 %v2148
    %2278 = vmatprep.subr.bf16.mxu0 %v2151
    %2279 = vmatpush1.bf16.msra.mxu0 %v2150
    %2280 = vmatprep.subr.bf16.mxu0 %v2153
    %2281 = vmatpush1.bf16.msra.mxu0 %v2152
    %2282 = vmatprep.subr.bf16.mxu0 %v2155
    %2283 = vmatpush1.bf16.msra.mxu0 %v2154
    %2284 = vmatprep.mubr.bf16.mxu0 %v1832
    %2285 = vmatmul.mubr.bf16.gmra.mrb[0].mxu0 %v1174
    %v2286 = vpop.f32.mrb[0].mxu0
    %v2287 = vadd.f32 %v1925, %v2286
    %v2288 = vpop.f32.mrb[0].mxu0
    %v2289 = vadd.f32 %v1929, %v2288
    %v2290 = vpop.f32.mrb[0].mxu0
    %v2291 = vadd.f32 %v1925, %v2290
    %v2292 = vpop.f32.mrb[0].mxu0
    %v2293 = vadd.f32 %v1929, %v2292
    %2294 = vdwg.mxu0
    %2295 = vmatprep.subr.bf16.mxu0 %v2157
    %2296 = vmatpush1.bf16.msra.mxu0 %v2156
    %2297 = vmatprep.subr.bf16.mxu0 %v2159
    %2298 = vmatpush1.bf16.msra.mxu0 %v2158
    %2299 = vmatprep.subr.bf16.mxu0 %v2161
    %2300 = vmatpush1.bf16.msra.mxu0 %v2160
    %2301 = vmatprep.subr.bf16.mxu0 %v2163
    %2302 = vmatpush1.bf16.msra.mxu0 %v2162
    %2303 = vmatprep.subr.bf16.mxu0 %v2165
    %2304 = vmatpush1.bf16.msra.mxu0 %v2164
    %2305 = vmatprep.subr.bf16.mxu0 %v2167
    %2306 = vmatpush1.bf16.msra.mxu0 %v2166
    %2307 = vmatprep.subr.bf16.mxu0 %v2169
    %2308 = vmatpush1.bf16.msra.mxu0 %v2168
    %2309 = vmatprep.subr.bf16.mxu0 %v2171
    %2310 = vmatpush1.bf16.msra.mxu0 %v2170
    %2311 = vmatprep.subr.bf16.mxu0 %v2173
    %2312 = vmatpush1.bf16.msra.mxu0 %v2172
    %2313 = vmatprep.subr.bf16.mxu0 %v2175
    %2314 = vmatpush1.bf16.msra.mxu0 %v2174
    %2315 = vmatprep.subr.bf16.mxu0 %v2177
    %2316 = vmatpush1.bf16.msra.mxu0 %v2176
    %2317 = vmatprep.subr.bf16.mxu0 %v2179
    %2318 = vmatpush1.bf16.msra.mxu0 %v2178
    %2319 = vmatprep.subr.bf16.mxu0 %v2181
    %2320 = vmatpush1.bf16.msra.mxu0 %v2180
    %2321 = vmatprep.subr.bf16.mxu0 %v2183
    %2322 = vmatpush1.bf16.msra.mxu0 %v2182
    %2323 = vmatprep.subr.bf16.mxu0 %v2185
    %2324 = vmatpush1.bf16.msra.mxu0 %v2184
    %2325 = vmatprep.subr.bf16.mxu0 %v2187
    %2326 = vmatpush1.bf16.msra.mxu0 %v2186
    %2327 = vmatprep.mubr.bf16.mxu0 %v1920
    %2328 = vmatmul.mubr.bf16.gmra.mrb[0].mxu0 %v1876
    %v2329 = vpop.f32.mrb[0].mxu0
    %v2330 = vadd.f32 %v2287, %v2329
    %v2331 = vpop.f32.mrb[0].mxu0
    %v2332 = vadd.f32 %v2289, %v2331
    %v2333 = vpop.f32.mrb[0].mxu0
    %v2334 = vadd.f32 %v2291, %v2333
    %v2335 = vpop.f32.mrb[0].mxu0
    %v2336 = vadd.f32 %v2293, %v2335
    %2337 = vdwg.mxu0
    %v2338 = vmax.f32 %v2330, 0.0
    %v2339 = vmax.f32 %v2332, 0.0
    %v2340 = vmax.f32 %v2334, 0.0
    %v2341 = vmax.f32 %v2336, 0.0
    %v2342 = vld [vmem:[%s11] sm:$0x3]
    %v2343 = vpack.c.bf16 %v2342, %v2342
    %v2344 = vpack.c.bf16 %v1724, %v1722
    %v2345 = vpack.c.bf16 %v1725, %v1723
    %v2346 = vpack.c.bf16 %v2340, %v2338
    %v2347 = vpack.c.bf16 %v2341, %v2339
    %v2349 = vsel %vm181, %v2343, 0
    %2351 = vmatprep.subr.bf16.mxu0 %v2345
    %2352 = vmatpush1.bf16.msra.mxu0 %v2344
    %2353 = vmatprep.subr.bf16.mxu0 0
    %2354 = vmatpush1.bf16.msra.mxu0 0
    %2355 = vmatprep.subr.bf16.mxu0 0
    %2356 = vmatpush1.bf16.msra.mxu0 0
    %2357 = vmatprep.subr.bf16.mxu0 0
    %2358 = vmatpush1.bf16.msra.mxu0 0
    %2359 = vmatprep.subr.bf16.mxu0 0
    %2360 = vmatpush1.bf16.msra.mxu0 0
    %2361 = vmatprep.subr.bf16.mxu0 0
    %2362 = vmatpush1.bf16.msra.mxu0 0
    %2363 = vmatprep.subr.bf16.mxu0 0
    %2364 = vmatpush1.bf16.msra.mxu0 0
    %2365 = vmatprep.subr.bf16.mxu0 0
    %2366 = vmatpush1.bf16.msra.mxu0 0
    %2367 = vmatprep.subr.bf16.mxu0 0
    %2368 = vmatpush1.bf16.msra.mxu0 0
    %2369 = vmatprep.subr.bf16.mxu0 0
    %2370 = vmatpush1.bf16.msra.mxu0 0
    %2371 = vmatprep.subr.bf16.mxu0 0
    %2372 = vmatpush1.bf16.msra.mxu0 0
    %2373 = vmatprep.subr.bf16.mxu0 0
    %2374 = vmatpush1.bf16.msra.mxu0 0
    %2375 = vmatprep.subr.bf16.mxu0 0
    %2376 = vmatpush1.bf16.msra.mxu0 0
    %2377 = vmatprep.subr.bf16.mxu0 0
    %2378 = vmatpush1.bf16.msra.mxu0 0
    %2379 = vmatprep.subr.bf16.mxu0 0
    %2380 = vmatpush1.bf16.msra.mxu0 0
    %2381 = vmatprep.subr.bf16.mxu0 0
    %2382 = vmatpush1.bf16.msra.mxu0 0
    %2383 = vmatprep.mubr.bf16.mxu0 0
    %2384 = vmatmul.mubr.bf16.gmra.mrb[0].mxu0 %v2349
    %v2385 = vpop.f32.mrb[0].mxu0
    %v2386 = vadd.f32 0.0, %v2385
    %v2387 = vpop.f32.mrb[0].mxu0
    %v2388 = vadd.f32 0.0, %v2387
    %v2389 = vpop.f32.mrb[0].mxu0
    %v2390 = vpop.f32.mrb[0].mxu0
    %2391 = vdwg.mxu0
    %2392 = vmatprep.subr.bf16.mxu0 %v2347
    %2393 = vmatpush1.bf16.msra.mxu0 %v2346
    %2394 = vmatprep.subr.bf16.mxu0 0
    %2395 = vmatpush1.bf16.msra.mxu0 0
    %2396 = vmatprep.subr.bf16.mxu0 0
    %2397 = vmatpush1.bf16.msra.mxu0 0
    %2398 = vmatprep.subr.bf16.mxu0 0
    %2399 = vmatpush1.bf16.msra.mxu0 0
    %2400 = vmatprep.subr.bf16.mxu0 0
    %2401 = vmatpush1.bf16.msra.mxu0 0
    %2402 = vmatprep.subr.bf16.mxu0 0
    %2403 = vmatpush1.bf16.msra.mxu0 0
    %2404 = vmatprep.subr.bf16.mxu0 0
    %2405 = vmatpush1.bf16.msra.mxu0 0
    %2406 = vmatprep.subr.bf16.mxu0 0
    %2407 = vmatpush1.bf16.msra.mxu0 0
    %2408 = vmatprep.subr.bf16.mxu0 0
    %2409 = vmatpush1.bf16.msra.mxu0 0
    %2410 = vmatprep.subr.bf16.mxu0 0
    %2411 = vmatpush1.bf16.msra.mxu0 0
    %2412 = vmatprep.subr.bf16.mxu0 0
    %2413 = vmatpush1.bf16.msra.mxu0 0
    %2414 = vmatprep.subr.bf16.mxu0 0
    %2415 = vmatpush1.bf16.msra.mxu0 0
    %2416 = vmatprep.subr.bf16.mxu0 0
    %2417 = vmatpush1.bf16.msra.mxu0 0
    %2418 = vmatprep.subr.bf16.mxu0 0
    %2419 = vmatpush1.bf16.msra.mxu0 0
    %2420 = vmatprep.subr.bf16.mxu0 0
    %2421 = vmatpush1.bf16.msra.mxu0 0
    %2422 = vmatprep.subr.bf16.mxu0 0
    %2423 = vmatpush1.bf16.msra.mxu0 0
    %2424 = vmatprep.mubr.bf16.mxu0 0
    %2425 = vmatmul.mubr.bf16.gmra.mrb[0].mxu0 %v2349
    %v2426 = vpop.f32.mrb[0].mxu0
    %v2427 = vadd.f32 0.0, %v2426
    %v2428 = vpop.f32.mrb[0].mxu0
    %v2429 = vadd.f32 0.0, %v2428
    %v2430 = vpop.f32.mrb[0].mxu0
    %v2431 = vpop.f32.mrb[0].mxu0
    %2432 = vdwg.mxu0
    %v2433 = vpack.c.bf16 %v2386, %v2386
    %v2434 = vpack.c.bf16 %v2388, %v2388
    %v2435 = vpack.c.bf16 %v2427, %v2427
    %v2436 = vpack.c.bf16 %v2429, %v2429
    %v2437 = vld [vmem:[%s12] sm:$0xf]
    %v2438 = vld [vmem:[%s12 + $0x4] sm:$0xf]
    %v2439 = vld [vmem:[%s12 + $0x8] sm:$0xf]
    %v2440 = vld [vmem:[%s12 + $0xc] sm:$0xf]
    %v2441 = vld [vmem:[%s12 + $0x10] sm:$0xf]
    %v2442 = vld [vmem:[%s12 + $0x14] sm:$0xf]
    %v2443 = vld [vmem:[%s12 + $0x18] sm:$0xf]
    %v2444 = vld [vmem:[%s12 + $0x1c] sm:$0xf]
    %v2445 = vld [vmem:[%s12 + $0x20] sm:$0xf]
    %v2446 = vld [vmem:[%s12 + $0x24] sm:$0xf]
    %v2447 = vld [vmem:[%s12 + $0x28] sm:$0xf]
    %v2448 = vld [vmem:[%s12 + $0x2c] sm:$0xf]
    %v2449 = vld [vmem:[%s12 + $0x30] sm:$0xf]
    %v2450 = vld [vmem:[%s12 + $0x34] sm:$0xf]
    %v2451 = vld [vmem:[%s12 + $0x38] sm:$0xf]
    %v2452 = vld [vmem:[%s12 + $0x3c] sm:$0xf]
    %v2453 = vld [vmem:[%s12 + $0x40] sm:$0xf]
    %v2454 = vld [vmem:[%s12 + $0x44] sm:$0xf]
    %v2455 = vld [vmem:[%s12 + $0x48] sm:$0xf]
    %v2456 = vld [vmem:[%s12 + $0x4c] sm:$0xf]
    %v2457 = vld [vmem:[%s12 + $0x50] sm:$0xf]
    %v2458 = vld [vmem:[%s12 + $0x54] sm:$0xf]
    %v2459 = vld [vmem:[%s12 + $0x58] sm:$0xf]
    %v2460 = vld [vmem:[%s12 + $0x5c] sm:$0xf]
    %v2461 = vld [vmem:[%s12 + $0x60] sm:$0xf]
    %v2462 = vld [vmem:[%s12 + $0x64] sm:$0xf]
    %v2463 = vld [vmem:[%s12 + $0x68] sm:$0xf]
    %v2464 = vld [vmem:[%s12 + $0x6c] sm:$0xf]
    %v2465 = vld [vmem:[%s12 + $0x70] sm:$0xf]
    %v2466 = vld [vmem:[%s12 + $0x74] sm:$0xf]
    %v2467 = vld [vmem:[%s12 + $0x78] sm:$0xf]
    %v2468 = vld [vmem:[%s12 + $0x7c] sm:$0xf]
    %v2469 = vld [vmem:[%s12 + $0x80] sm:$0xf]
    %v2470 = vld [vmem:[%s12 + $0x84] sm:$0xf]
    %v2471 = vld [vmem:[%s12 + $0x88] sm:$0xf]
    %v2472 = vld [vmem:[%s12 + $0x8c] sm:$0xf]
    %v2473 = vld [vmem:[%s12 + $0x90] sm:$0xf]
    %v2474 = vld [vmem:[%s12 + $0x94] sm:$0xf]
    %v2475 = vld [vmem:[%s12 + $0x98] sm:$0xf]
    %v2476 = vld [vmem:[%s12 + $0x9c] sm:$0xf]
    %v2477 = vld [vmem:[%s12 + $0xa0] sm:$0xf]
    %v2478 = vld [vmem:[%s12 + $0xa4] sm:$0xf]
    %v2479 = vld [vmem:[%s12 + $0xa8] sm:$0xf]
    %v2480 = vld [vmem:[%s12 + $0xac] sm:$0xf]
    %v2481 = vld [vmem:[%s12 + $0xb0] sm:$0xf]
    %v2482 = vld [vmem:[%s12 + $0xb4] sm:$0xf]
    %v2483 = vld [vmem:[%s12 + $0xb8] sm:$0xf]
    %v2484 = vld [vmem:[%s12 + $0xbc] sm:$0xf]
    %v2485 = vld [vmem:[%s12 + $0xc0] sm:$0xf]
    %v2486 = vld [vmem:[%s12 + $0xc4] sm:$0xf]
    %v2487 = vld [vmem:[%s12 + $0xc8] sm:$0xf]
    %v2488 = vld [vmem:[%s12 + $0xcc] sm:$0xf]
    %v2489 = vld [vmem:[%s12 + $0xd0] sm:$0xf]
    %v2490 = vld [vmem:[%s12 + $0xd4] sm:$0xf]
    %v2491 = vld [vmem:[%s12 + $0xd8] sm:$0xf]
    %v2492 = vld [vmem:[%s12 + $0xdc] sm:$0xf]
    %v2493 = vld [vmem:[%s12 + $0xe0] sm:$0xf]
    %v2494 = vld [vmem:[%s12 + $0xe4] sm:$0xf]
    %v2495 = vld [vmem:[%s12 + $0xe8] sm:$0xf]
    %v2496 = vld [vmem:[%s12 + $0xec] sm:$0xf]
    %v2497 = vld [vmem:[%s12 + $0xf0] sm:$0xf]
    %v2498 = vld [vmem:[%s12 + $0xf4] sm:$0xf]
    %v2499 = vld [vmem:[%s12 + $0xf8] sm:$0xf]
    %v2500 = vld [vmem:[%s12 + $0xfc] sm:$0xf]
    %v2501 = vld [vmem:[%s13] sm:$0x1]
    %v2503 = vlaneseq
    %v2504 = vshrl.u32 %v2503, 7
    %v2505 = vsub.s32 0, %v2504
    %v2506 = vrot.slane %v2501, %v2505
    %v2572 = vunpack.c.l.b16 %v2437
    %v2573 = vunpack.c.l.b16 %v2438
    %v2574 = vunpack.c.l.b16 %v2439
    %v2575 = vunpack.c.l.b16 %v2440
    %v2576 = vunpack.c.l.b16 %v2441
    %v2577 = vunpack.c.l.b16 %v2442
    %v2578 = vunpack.c.l.b16 %v2443
    %v2579 = vunpack.c.l.b16 %v2444
    %v2580 = vunpack.c.l.b16 %v2445
    %v2581 = vunpack.c.l.b16 %v2446
    %v2582 = vunpack.c.l.b16 %v2447
    %v2583 = vunpack.c.l.b16 %v2448
    %v2584 = vunpack.c.l.b16 %v2449
    %v2585 = vunpack.c.l.b16 %v2450
    %v2586 = vunpack.c.l.b16 %v2451
    %v2587 = vunpack.c.l.b16 %v2452
    %v2588 = vunpack.c.l.b16 %v2453
    %v2589 = vunpack.c.l.b16 %v2454
    %v2590 = vunpack.c.l.b16 %v2455
    %v2591 = vunpack.c.l.b16 %v2456
    %v2592 = vunpack.c.l.b16 %v2457
    %v2593 = vunpack.c.l.b16 %v2458
    %v2594 = vunpack.c.l.b16 %v2459
    %v2595 = vunpack.c.l.b16 %v2460
    %v2596 = vunpack.c.l.b16 %v2461
    %v2597 = vunpack.c.l.b16 %v2462
    %v2598 = vunpack.c.l.b16 %v2463
    %v2599 = vunpack.c.l.b16 %v2464
    %v2600 = vunpack.c.l.b16 %v2465
    %v2601 = vunpack.c.l.b16 %v2466
    %v2602 = vunpack.c.l.b16 %v2467
    %v2603 = vunpack.c.l.b16 %v2468
    %v2604 = vunpack.c.l.b16 %v2469
    %v2605 = vunpack.c.l.b16 %v2470
    %v2606 = vunpack.c.l.b16 %v2471
    %v2607 = vunpack.c.l.b16 %v2472
    %v2608 = vunpack.c.l.b16 %v2473
    %v2609 = vunpack.c.l.b16 %v2474
    %v2610 = vunpack.c.l.b16 %v2475
    %v2611 = vunpack.c.l.b16 %v2476
    %v2612 = vunpack.c.l.b16 %v2477
    %v2613 = vunpack.c.l.b16 %v2478
    %v2614 = vunpack.c.l.b16 %v2479
    %v2615 = vunpack.c.l.b16 %v2480
    %v2616 = vunpack.c.l.b16 %v2481
    %v2617 = vunpack.c.l.b16 %v2482
    %v2618 = vunpack.c.l.b16 %v2483
    %v2619 = vunpack.c.l.b16 %v2484
    %v2620 = vunpack.c.l.b16 %v2485
    %v2621 = vunpack.c.l.b16 %v2486
    %v2622 = vunpack.c.l.b16 %v2487
    %v2623 = vunpack.c.l.b16 %v2488
    %v2624 = vunpack.c.l.b16 %v2489
    %v2625 = vunpack.c.l.b16 %v2490
    %v2626 = vunpack.c.l.b16 %v2491
    %v2627 = vunpack.c.l.b16 %v2492
    %v2628 = vunpack.c.l.b16 %v2493
    %v2629 = vunpack.c.l.b16 %v2494
    %v2630 = vunpack.c.l.b16 %v2495
    %v2631 = vunpack.c.l.b16 %v2496
    %v2632 = vunpack.c.l.b16 %v2497
    %v2633 = vunpack.c.l.b16 %v2498
    %v2634 = vunpack.c.l.b16 %v2499
    %v2635 = vunpack.c.l.b16 %v2500
    %v2636 = vpack.c.b16 %v2573, %v2572
    %v2637 = vpack.c.b16 %v2575, %v2574
    %v2638 = vpack.c.b16 %v2577, %v2576
    %v2639 = vpack.c.b16 %v2579, %v2578
    %v2640 = vpack.c.b16 %v2581, %v2580
    %v2641 = vpack.c.b16 %v2583, %v2582
    %v2642 = vpack.c.b16 %v2585, %v2584
    %v2643 = vpack.c.b16 %v2587, %v2586
    %v2644 = vpack.c.b16 %v2589, %v2588
    %v2645 = vpack.c.b16 %v2591, %v2590
    %v2646 = vpack.c.b16 %v2593, %v2592
    %v2647 = vpack.c.b16 %v2595, %v2594
    %v2648 = vpack.c.b16 %v2597, %v2596
    %v2649 = vpack.c.b16 %v2599, %v2598
    %v2650 = vpack.c.b16 %v2601, %v2600
    %v2651 = vpack.c.b16 %v2603, %v2602
    %v2652 = vpack.c.b16 %v2605, %v2604
    %v2653 = vpack.c.b16 %v2607, %v2606
    %v2654 = vpack.c.b16 %v2609, %v2608
    %v2655 = vpack.c.b16 %v2611, %v2610
    %v2656 = vpack.c.b16 %v2613, %v2612
    %v2657 = vpack.c.b16 %v2615, %v2614
    %v2658 = vpack.c.b16 %v2617, %v2616
    %v2659 = vpack.c.b16 %v2619, %v2618
    %v2660 = vpack.c.b16 %v2621, %v2620
    %v2661 = vpack.c.b16 %v2623, %v2622
    %v2662 = vpack.c.b16 %v2625, %v2624
    %v2663 = vpack.c.b16 %v2627, %v2626
    %v2664 = vpack.c.b16 %v2629, %v2628
    %v2665 = vpack.c.b16 %v2631, %v2630
    %v2666 = vpack.c.b16 %v2633, %v2632
    %v2667 = vpack.c.b16 %v2635, %v2634
    %2700 = vmatprep.subr.bf16.mxu0 0
    %2701 = vmatpush1.bf16.msra.mxu0 %v2636
    %2702 = vmatprep.subr.bf16.mxu0 0
    %2703 = vmatpush1.bf16.msra.mxu0 %v2637
    %2704 = vmatprep.subr.bf16.mxu0 0
    %2705 = vmatpush1.bf16.msra.mxu0 %v2638
    %2706 = vmatprep.subr.bf16.mxu0 0
    %2707 = vmatpush1.bf16.msra.mxu0 %v2639
    %2708 = vmatprep.subr.bf16.mxu0 0
    %2709 = vmatpush1.bf16.msra.mxu0 %v2640
    %2710 = vmatprep.subr.bf16.mxu0 0
    %2711 = vmatpush1.bf16.msra.mxu0 %v2641
    %2712 = vmatprep.subr.bf16.mxu0 0
    %2713 = vmatpush1.bf16.msra.mxu0 %v2642
    %2714 = vmatprep.subr.bf16.mxu0 0
    %2715 = vmatpush1.bf16.msra.mxu0 %v2643
    %2716 = vmatprep.subr.bf16.mxu0 0
    %2717 = vmatpush1.bf16.msra.mxu0 %v2644
    %2718 = vmatprep.subr.bf16.mxu0 0
    %2719 = vmatpush1.bf16.msra.mxu0 %v2645
    %2720 = vmatprep.subr.bf16.mxu0 0
    %2721 = vmatpush1.bf16.msra.mxu0 %v2646
    %2722 = vmatprep.subr.bf16.mxu0 0
    %2723 = vmatpush1.bf16.msra.mxu0 %v2647
    %2724 = vmatprep.subr.bf16.mxu0 0
    %2725 = vmatpush1.bf16.msra.mxu0 %v2648
    %2726 = vmatprep.subr.bf16.mxu0 0
    %2727 = vmatpush1.bf16.msra.mxu0 %v2649
    %2728 = vmatprep.subr.bf16.mxu0 0
    %2729 = vmatpush1.bf16.msra.mxu0 %v2650
    %2730 = vmatprep.subr.bf16.mxu0 0
    %2731 = vmatpush1.bf16.msra.mxu0 %v2651
    %2732 = vmatprep.mubr.bf16.mxu0 %v2434
    %2733 = vmatmul.mubr.bf16.gmra.mrb[0].mxu0 %v2433
    %v2734 = vpop.f32.mrb[0].mxu0
    %v2735 = vadd.f32 %v2506, %v2734
    %v2736 = vpop.f32.mrb[0].mxu0
    %v2737 = vpop.f32.mrb[0].mxu0
    %v2738 = vpop.f32.mrb[0].mxu0
    %2739 = vdwg.mxu0
    %2740 = vmatprep.subr.bf16.mxu0 0
    %2741 = vmatpush1.bf16.msra.mxu0 %v2652
    %2742 = vmatprep.subr.bf16.mxu0 0
    %2743 = vmatpush1.bf16.msra.mxu0 %v2653
    %2744 = vmatprep.subr.bf16.mxu0 0
    %2745 = vmatpush1.bf16.msra.mxu0 %v2654
    %2746 = vmatprep.subr.bf16.mxu0 0
    %2747 = vmatpush1.bf16.msra.mxu0 %v2655
    %2748 = vmatprep.subr.bf16.mxu0 0
    %2749 = vmatpush1.bf16.msra.mxu0 %v2656
    %2750 = vmatprep.subr.bf16.mxu0 0
    %2751 = vmatpush1.bf16.msra.mxu0 %v2657
    %2752 = vmatprep.subr.bf16.mxu0 0
    %2753 = vmatpush1.bf16.msra.mxu0 %v2658
    %2754 = vmatprep.subr.bf16.mxu0 0
    %2755 = vmatpush1.bf16.msra.mxu0 %v2659
    %2756 = vmatprep.subr.bf16.mxu0 0
    %2757 = vmatpush1.bf16.msra.mxu0 %v2660
    %2758 = vmatprep.subr.bf16.mxu0 0
    %2759 = vmatpush1.bf16.msra.mxu0 %v2661
    %2760 = vmatprep.subr.bf16.mxu0 0
    %2761 = vmatpush1.bf16.msra.mxu0 %v2662
    %2762 = vmatprep.subr.bf16.mxu0 0
    %2763 = vmatpush1.bf16.msra.mxu0 %v2663
    %2764 = vmatprep.subr.bf16.mxu0 0
    %2765 = vmatpush1.bf16.msra.mxu0 %v2664
    %2766 = vmatprep.subr.bf16.mxu0 0
    %2767 = vmatpush1.bf16.msra.mxu0 %v2665
    %2768 = vmatprep.subr.bf16.mxu0 0
    %2769 = vmatpush1.bf16.msra.mxu0 %v2666
    %2770 = vmatprep.subr.bf16.mxu0 0
    %2771 = vmatpush1.bf16.msra.mxu0 %v2667
    %2772 = vmatprep.mubr.bf16.mxu0 %v2436
    %2773 = vmatmul.mubr.bf16.gmra.mrb[0].mxu0 %v2435
    %v2774 = vpop.f32.mrb[0].mxu0
    %v2775 = vadd.f32 %v2735, %v2774
    %v2776 = vpop.f32.mrb[0].mxu0
    %v2777 = vpop.f32.mrb[0].mxu0
    %v2778 = vpop.f32.mrb[0].mxu0
    %2779 = vdwg.mxu0
    %v2780 = vlaneseq
    %v2781 = vand.u32 %v2780, 127
    %vm2782 = vcmp.lt.s32.totalorder %v2781, 4
    %v2783 = vsel %vm2782, %v2775, -1e+30
    %vm2784 = vcmask 1041408
    %v2785 = vsel %vm2784, %v2783, -inf
    %2786 = vmax.xlane.f32.xlu0 %v2785
    %v2787 = vpop.xlane.xlu0 %2786
    %v2788 = vsub.f32 %v2783, %v2787
    %v2789 = vmul.f32 %v2788, 1.442695
    %v2790 = vpow.pop %v2789
    %v2791 = vsel %vm2784, %v2790, 0.0
    %2792 = vadd.xlane.f32.xlu0 %v2791
    %v2793 = vpop.xlane.xlu0 %2792
    %v2794 = vlog2.pop %v2793
    %v2795 = vmul.f32 %v2794, 0.6931472
    %v2796 = vsub.f32 %v2788, %v2795
    %2797 = vst [vmem:[#allocation10] sm:$0x3] %v2796
    // Predicated region
    $region74: #{tpu_custom_call.1} parent=1 // pred_check
      _
    $region75: #{tpu_custom_call.1} parent=1 // pred_check_branch
      %2799 = sbr.rel (0) target = $region77
    $region76: #{tpu_custom_call.1} parent=1 // pred_region
      %s2801 = ssub.s32 32, 32
      %2802 = vsyncadd [#allocation4], %s2801
      %s2804 = sshll.u32 [#allocation10], 4
      %s2805 = int_to_ptr.vmem [resolvable:$true] %s2804
      %2807 = dma.vmem_to_hbm [thread:$0]  %s2805, 32, %s14, [#allocation4]
    $region77: #{tpu_custom_call.1} parent=1 // pred_fallthru
      _
    // Predicated region
    $region78: #{tpu_custom_call.1} parent=1 // pred_check
      _
    $region79: #{tpu_custom_call.1} parent=1 // pred_check_branch
      %2809 = sbr.rel (0) target = $region81
    $region80: #{tpu_custom_call.1} parent=1 // pred_region
      %2810 = dma.done [#allocation4], 32
    $region81: #{tpu_custom_call.1} parent=1 // pred_fallthru
      _
    %2811 = vsyncpa [#allocation3], 1
    %2812 = vsyncpa [#allocation6], 1
    %2813 = vsyncpa [#allocation9], 1
    %2814 = vsyncpa [#allocation4], 1

</llo_original>
